<compile_context>
chip_gen: v5e
topology: v5e:2x2
jax: 0.10.0
libtpu: 0.0.40
codegen_flags: <defaults>
</compile_context>

<pallas_src>
import math

import jax
import jax.numpy as jnp
from jax import lax
from jax.experimental import pallas as pl
from jax.experimental.pallas import tpu as pltpu

SELU_ALPHA = 1.6732632423543772
SELU_SCALE = 1.0507009873554805
GN_EPS = 1e-5
NEG_BIG = -1e30  # bias for padded clusters -> softmax prob exactly 0


def _selu(x):
    return SELU_SCALE * jnp.where(x > 0, x, SELU_ALPHA * (jnp.exp(x) - 1.0))


def _round_up(v, m):
    return ((v + m - 1) // m) * m


def _vmem_limit_bytes():
    cap = 128 * 1024 * 1024
    try:
        info = pltpu.get_tpu_info()
        cap = int(getattr(info, "vmem_capacity_bytes", cap) or cap)
    except Exception:
        pass
    return (cap * 3) // 4      # ~96 MiB on v5e/v6e, ~48 MiB on v7x


# ----------------------------------------------------------------------------
# Fused per-graph kernel: GraphNorm -> GCNConv -> SELU -> DMoN pooling
#   one graph per grid step; adjacency arrives transposed (tgt x src) in bf16.
# ----------------------------------------------------------------------------
def make_fused_kernel(k_real, k_store):
    inv_sqrt_k = 1.0 / math.sqrt(float(k_real))    # 1 / ||I_K||_F (real K)

    def fused_kernel(counts_ref,                               # SMEM (B,) int32
                     x_ref, adjt_ref,
                     gnw_ref, gnb_ref, gnms_ref,
                     wgcn_ref, bgcn_ref, wmlp_ref, bmlp_ref,
                     st_ref, logp_ref, loss_ref):
        b = pl.program_id(0)
        n = counts_ref[b]                                      # valid nodes in graph b
        x = x_ref[0]                                           # (Np, Fp) f32 (pad rows zero)
        adj_t = adjt_ref[0]                                    # (Np, Np) bf16, adj_t[tgt, src]
        Np = x.shape[0]

        node_idx = lax.broadcasted_iota(jnp.int32, (Np, 1), 0)
        mask = (node_idx < n).astype(jnp.float32)              # (Np, 1) valid-node mask
        inv_n = 1.0 / jnp.maximum(n.astype(jnp.float32), 1.0)

        # ---------------- GraphNorm (per graph) ----------------
        mean = jnp.sum(x, axis=0, keepdims=True) * inv_n                       # (1, Fp)
        cent = (x - mean * gnms_ref[...]) * mask
        var = jnp.sum(cent * cent, axis=0, keepdims=True) * inv_n              # (1, Fp)
        xn = gnw_ref[...] * cent * lax.rsqrt(var + GN_EPS) + gnb_ref[...]

        # ---------------- GCNConv + SELU ----------------
        # in-degree + self loop (valid nodes); f32 accumulation for exact counts
        deg = jnp.sum(adj_t.astype(jnp.float32), axis=1, keepdims=True) + mask  # (Np, 1)
        dinv = jnp.where(deg > 0.0, lax.rsqrt(deg), 0.0)                        # 0 on pad rows

        xw = jnp.dot(xn.astype(jnp.bfloat16), wgcn_ref[...],
                     preferred_element_type=jnp.float32)                        # (Np, H)
        y = (dinv * xw).astype(jnp.bfloat16)
        agg = jnp.dot(adj_t, y, preferred_element_type=jnp.float32)             # A^T msg-pass
        h = _selu(dinv * (agg + dinv * xw) + bgcn_ref[...]) * mask              # (Np, H) f32
        hb = h.astype(jnp.bfloat16)

        # ---------------- DMoN pooling ----------------
        # assignment MLP + softmax (dropout p=0 -> no-op); padded clusters carry -1e30 bias
        logits = jnp.dot(hb, wmlp_ref[...],
                         preferred_element_type=jnp.float32) + bmlp_ref[...]    # (Np, Kp)
        lmax = jnp.max(logits, axis=-1, keepdims=True)
        e = jnp.exp(logits - lmax)
        sm = (e * pl.reciprocal(jnp.sum(e, axis=-1, keepdims=True), approx=True)) * mask
        smb = sm.astype(jnp.bfloat16)

        # transpose once; reused for the pooled matmul, S^T S and the s store
        sm_t = jnp.transpose(sm)                                                # (Kp, Np) f32
        st8 = sm_t[:k_store]                                                    # (K8, Np)
        st8b = st8.astype(jnp.bfloat16)

        # pooled node features (only the real/stored cluster rows) + log_softmax
        pooled = jnp.dot(st8b, hb, preferred_element_type=jnp.float32)          # (K8, H)
        out = _selu(pooled)
        omax = jnp.max(out, axis=-1, keepdims=True)
        shifted = out - omax
        lse = jnp.log(jnp.sum(jnp.exp(shifted), axis=-1, keepdims=True))
        logp_ref[0] = shifted - lse
        st_ref[0] = st8

        # spectral (modularity) loss via trace identities
        asm = jnp.dot(adj_t, smb, preferred_element_type=jnp.float32)           # (Np, Kp) = A @ S
        tr_sas = jnp.sum(sm * asm, keepdims=True)                               # tr(S^T A S)
        cb = jnp.sum(asm, axis=0, keepdims=True)                                # (1, Kp) = d^T S
        two_m = jnp.sum(deg - mask, keepdims=True)                              # total edge weight
        # NOTE: edgeless graph -> two_m == 0 -> nan/inf, same failure mode as torch reference.
        spectral = -(tr_sas - jnp.sum(cb * cb, keepdims=True) / two_m) / two_m  # (1, 1)

        # orthogonality loss, closed form (no eye_k materialization)
        ss8 = jnp.dot(st8b, smb, preferred_element_type=jnp.float32)            # (K8, Kp)
        ss_fro = jnp.sqrt(jnp.sum(ss8 * ss8, keepdims=True))                    # ||S^T S||_F
        tr_ss = jnp.sum(sm * sm, keepdims=True)                                 # tr(S^T S)
        ortho = jnp.sqrt(jnp.maximum(2.0 - 2.0 * tr_ss * inv_sqrt_k / ss_fro, 0.0))

        # cluster-size norm (cross-graph combine happens in the wrapper)
        csize = jnp.sum(sm, axis=0, keepdims=True)                              # (1, Kp)
        cnorm = jnp.sqrt(jnp.sum(csize * csize, keepdims=True))

        lane = lax.broadcasted_iota(jnp.int32, (1, 1, loss_ref.shape[-1]), 2)
        loss_ref[...] = jnp.where(lane == 0, spectral,
                                  jnp.where(lane == 1, ortho,
                                            jnp.where(lane == 2, cnorm, 0.0)))

    return fused_kernel


# ----------------------------------------------------------------------------
# Wrappers / glue
# ----------------------------------------------------------------------------
def init_params(key, fin, hidden, k):
    k1, k2, k3 = jax.random.split(key, 3)
    return dict(
        gn_w=jnp.ones((1, fin), jnp.float32),          # GraphNorm defaults
        gn_b=jnp.zeros((1, fin), jnp.float32),
        gn_ms=jnp.ones((1, fin), jnp.float32),
        w_gcn=jax.random.normal(k1, (fin, hidden), jnp.float32)
        * jnp.sqrt(2.0 / (fin + hidden)),
        b_gcn=jnp.zeros((1, hidden), jnp.float32),      # GCNConv bias init = zeros
        w_mlp=jax.random.normal(k2, (hidden, k), jnp.float32)
        * jnp.sqrt(2.0 / (hidden + k)),
        b_mlp=jax.random.normal(k3, (1, k), jnp.float32) * 0.01,
    )


def net_forward(x, edge_index, batch, params, num_graphs, max_nodes):
    N, fin = x.shape
    B = num_graphs
    H = params["w_gcn"].shape[1]
    K = params["w_mlp"].shape[1]

    # lane-dense padded sizes
    Np = _round_up(max(max_nodes, 8), 128)
    Fp = _round_up(fin, 128)
    Kp = _round_up(K, 128)          # cluster lanes in the matmuls / softmax
    K8 = _round_up(K, 8)            # cluster sublanes actually stored
    assert K8 <= Kp

    # per-graph node counts / within-graph positions (sorted batch, as in PyG)
    counts = jnp.sum((batch[:, None] == jnp.arange(B, dtype=batch.dtype)[None, :]
                      ).astype(jnp.int32), axis=0)                          # (B,)
    offsets = jnp.concatenate([jnp.zeros((1,), jnp.int32), jnp.cumsum(counts)[:-1]])
    pos = jnp.arange(N, dtype=jnp.int32) - offsets[batch]
    src, tgt = edge_index[0], edge_index[1]

    # to_dense_batch / to_dense_adj glue (padded node + feature dims).
    # Adjacency stored transposed (tgt, src) and in bf16: every in-kernel use
    # (GCN A^T aggregation, A @ S, degree row-sums) is a natural contraction.
    # TODO(synk): edges are assumed intra-graph (true for PyG Batch objects).
    x_pad = jnp.pad(x.astype(jnp.float32), ((0, 0), (0, Fp - fin)))
    xd = jnp.zeros((B, Np, Fp), jnp.float32).at[batch, pos].set(x_pad)
    adjT = jnp.zeros((B, Np, Np), jnp.bfloat16
                     ).at[batch[tgt], pos[tgt], pos[src]].add(jnp.bfloat16(1.0))

    # parameter padding: features -> Fp lanes, clusters -> Kp lanes; weights bf16
    gn_w = jnp.pad(params["gn_w"], ((0, 0), (0, Fp - fin)), constant_values=1.0)
    gn_b = jnp.pad(params["gn_b"], ((0, 0), (0, Fp - fin)))
    gn_ms = jnp.pad(params["gn_ms"], ((0, 0), (0, Fp - fin)), constant_values=1.0)
    w_gcn = jnp.pad(params["w_gcn"], ((0, Fp - fin), (0, 0))).astype(jnp.bfloat16)
    b_gcn = params["b_gcn"]
    w_mlp = jnp.pad(params["w_mlp"], ((0, 0), (0, Kp - K))).astype(jnp.bfloat16)
    b_mlp = jnp.pad(params["b_mlp"], ((0, 0), (0, Kp - K)), constant_values=NEG_BIG)

    kernel = make_fused_kernel(K, K8)
    grid_spec = pltpu.PrefetchScalarGridSpec(
        num_scalar_prefetch=1,                       # counts -> SMEM, indexed by program_id
        grid=(B,),
        in_specs=[
            pl.BlockSpec((1, Np, Fp), lambda b, c: (b, 0, 0)),
            pl.BlockSpec((1, Np, Np), lambda b, c: (b, 0, 0)),
            # constant-index parameter blocks stay resident across the batch grid
            pl.BlockSpec((1, Fp), lambda b, c: (0, 0)),
            pl.BlockSpec((1, Fp), lambda b, c: (0, 0)),
            pl.BlockSpec((1, Fp), lambda b, c: (0, 0)),
            pl.BlockSpec((Fp, H), lambda b, c: (0, 0)),
            pl.BlockSpec((1, H), lambda b, c: (0, 0)),
            pl.BlockSpec((H, Kp), lambda b, c: (0, 0)),
            pl.BlockSpec((1, Kp), lambda b, c: (0, 0)),
        ],
        out_specs=(
            pl.BlockSpec((1, K8, Np), lambda b, c: (b, 0, 0)),   # s, stored transposed
            pl.BlockSpec((1, K8, H), lambda b, c: (b, 0, 0)),
            pl.BlockSpec((1, 1, 128), lambda b, c: (b, 0, 0)),
        ),
    )
    # TODO(synk): for very large Np (f32 ~2048, bf16 ~2900 on v7x's 64 MiB VMEM)
    # the (1, Np, Np) adjacency block should gain a node-tile grid axis with a
    # VMEM accumulator for the (Np,H)/(Np,Kp) aggregations.
    s_t, logp_p, losses = pl.pallas_call(
        kernel,
        out_shape=(
            jax.ShapeDtypeStruct((B, K8, Np), jnp.float32),
            jax.ShapeDtypeStruct((B, K8, H), jnp.float32),
            jax.ShapeDtypeStruct((B, 1, 128), jnp.float32),
        ),
        grid_spec=grid_spec,
        compiler_params=pltpu.CompilerParams(
            dimension_semantics=("parallel",),        # graphs are independent (megacore)
            vmem_limit_bytes=_vmem_limit_bytes(),
        ),
    )(counts, xd, adjT, gn_w, gn_b, gn_ms, w_gcn, b_gcn, w_mlp, b_mlp)

    s = jnp.transpose(s_t[:, :K, :max_nodes], (0, 2, 1))    # (B, Nmax, K)
    logp = logp_p[:, :K, :]                                  # (B, K, H)

    spectral = jnp.mean(losses[:, 0, 0])
    ortho = jnp.mean(losses[:, 0, 1])
    cnorm = losses[:, 0, 2]                          # (B,) ||cluster_size|| per graph
    msum = counts.astype(jnp.float32)[:, None]       # (B, 1) valid nodes per graph
    # reproduces torch_geometric DMoNPooling's (B,) / (B,1) -> (B,B) broadcast
    cluster = jnp.mean(cnorm[None, :] / msum * jnp.sqrt(jnp.float32(K)) - 1.0)
    total_loss = spectral + ortho + cluster

    return logp, total_loss, s


def ring_edges(n, offset):
    src = jnp.arange(n, dtype=jnp.int32) + offset
    dst = (jnp.arange(n, dtype=jnp.int32) + 1) % n + offset
    fwd = jnp.stack([src, dst])
    bwd = jnp.stack([dst, src])
    return jnp.concatenate([fwd, bwd], axis=1)


if __name__ == "__main__":
    key = jax.random.PRNGKey(0)
    kx, kp = jax.random.split(key)

    sizes = [6, 8]                 # two graphs
    B = len(sizes)
    Nmax = max(sizes)
    N = sum(sizes)
    FIN, HID, K = 16, 128, 4       # in_channels=16, hidden_channels=128 (default), out_channels=4

    x = jax.random.normal(kx, (N, FIN), jnp.float32)
    edges, off = [], 0
    for n in sizes:
        edges.append(ring_edges(n, off))
        off += n
    edge_index = jnp.concatenate(edges, axis=1)            # (2, 28)
    batch = jnp.concatenate(
        [jnp.full((n,), i, jnp.int32) for i, n in enumerate(sizes)])  # (14,)

    params = init_params(kp, FIN, HID, K)

    logp, loss, s = net_forward(x, edge_index, batch, params, B, Nmax)
    jax.block_until_ready((logp, loss, s))

    assert logp.shape == (B, K, HID)
    assert s.shape == (B, Nmax, K)
    assert bool(jnp.isfinite(loss))
    print("KERNEL_OK")
</pallas_src>

<mosaic_0001>
module attributes {stable_mosaic.version = 11 : i64} {
  func.func @fused_kernel(%arg0: i32, %arg1: memref<2xi32, #tpu.memory_space<smem>>, %arg2: memref<1x128x128xf32, #tpu.memory_space<vmem>>, %arg3: memref<1x128x128xbf16, #tpu.memory_space<vmem>>, %arg4: memref<1x128xf32, #tpu.memory_space<vmem>>, %arg5: memref<1x128xf32, #tpu.memory_space<vmem>>, %arg6: memref<1x128xf32, #tpu.memory_space<vmem>>, %arg7: memref<128x128xbf16, #tpu.memory_space<vmem>>, %arg8: memref<1x128xf32, #tpu.memory_space<vmem>>, %arg9: memref<128x128xbf16, #tpu.memory_space<vmem>>, %arg10: memref<1x128xf32, #tpu.memory_space<vmem>>, %arg11: memref<1x8x128xf32, #tpu.memory_space<vmem>>, %arg12: memref<1x8x128xf32, #tpu.memory_space<vmem>>, %arg13: memref<1x1x128xf32, #tpu.memory_space<vmem>>) attributes {dimension_semantics = [#tpu.dimension_semantics<parallel>], iteration_bounds = array<i64: 2>, scalar_prefetch = 1 : i64, scratch_operands = 0 : i64, tpu.core_type = #tpu.core_type<tc>, window_params = [{transform_indices = @transform_0, window_bounds = array<i64: 1, 128, 128>}, {transform_indices = @transform_1, window_bounds = array<i64: 1, 128, 128>}, {pipeline_mode = #tpu.pipeline_mode<synchronous>, transform_indices = @transform_2, window_bounds = array<i64: 1, 128>}, {pipeline_mode = #tpu.pipeline_mode<synchronous>, transform_indices = @transform_3, window_bounds = array<i64: 1, 128>}, {pipeline_mode = #tpu.pipeline_mode<synchronous>, transform_indices = @transform_4, window_bounds = array<i64: 1, 128>}, {pipeline_mode = #tpu.pipeline_mode<synchronous>, transform_indices = @transform_5, window_bounds = array<i64: 128, 128>}, {pipeline_mode = #tpu.pipeline_mode<synchronous>, transform_indices = @transform_6, window_bounds = array<i64: 1, 128>}, {pipeline_mode = #tpu.pipeline_mode<synchronous>, transform_indices = @transform_7, window_bounds = array<i64: 128, 128>}, {pipeline_mode = #tpu.pipeline_mode<synchronous>, transform_indices = @transform_8, window_bounds = array<i64: 1, 128>}, {transform_indices = @transform_9, window_bounds = array<i64: 1, 8, 128>}, {transform_indices = @transform_10, window_bounds = array<i64: 1, 8, 128>}, {transform_indices = @transform_11, window_bounds = array<i64: 1, 1, 128>}]} {
    %0 = arith.index_cast %arg0 : i32 to index
    %1 = memref.load %arg1[%0] : memref<2xi32, #tpu.memory_space<smem>>
    %c0 = arith.constant 0 : index
    %c0_0 = arith.constant 0 : index
    %c0_1 = arith.constant 0 : index
    %2 = vector.load %arg2[%c0, %c0_0, %c0_1] : memref<1x128x128xf32, #tpu.memory_space<vmem>>, vector<1x128x128xf32>
    %3 = vector.shape_cast %2 : vector<1x128x128xf32> to vector<128x128xf32>
    %c0_2 = arith.constant 0 : index
    %c0_3 = arith.constant 0 : index
    %c0_4 = arith.constant 0 : index
    %4 = vector.load %arg3[%c0_2, %c0_3, %c0_4] : memref<1x128x128xbf16, #tpu.memory_space<vmem>>, vector<1x128x128xbf16>
    %5 = vector.shape_cast %4 : vector<1x128x128xbf16> to vector<128x128xbf16>
    %6 = tpu.iota {dimensions = array<i32: 0>} : vector<128x1xi32>
    %7 = vector.broadcast %1 : i32 to vector<128x1xi32>
    %8 = arith.cmpi slt, %6, %7 : vector<128x1xi32>
    %9 = arith.extui %8 : vector<128x1xi1> to vector<128x1xi32>
    %10 = arith.sitofp %9 : vector<128x1xi32> to vector<128x1xf32>
    %11 = arith.sitofp %1 : i32 to f32
    %cst = arith.constant 1.000000e+00 : f32
    %12 = arith.maximumf %11, %cst : f32
    %cst_5 = arith.constant 1.000000e+00 : f32
    %13 = arith.divf %cst_5, %12 : f32
    %cst_6 = arith.constant dense<0.000000e+00> : vector<128xf32>
    %14 = vector.multi_reduction <add>, %3, %cst_6 [0] : vector<128x128xf32> to vector<128xf32>
    %15 = vector.shape_cast %14 : vector<128xf32> to vector<1x128xf32>
    %16 = vector.broadcast %13 : f32 to vector<1x128xf32>
    %17 = arith.mulf %15, %16 : vector<1x128xf32>
    %c0_7 = arith.constant 0 : index
    %c0_8 = arith.constant 0 : index
    %18 = vector.load %arg6[%c0_7, %c0_8] : memref<1x128xf32, #tpu.memory_space<vmem>>, vector<1x128xf32>
    %19 = arith.mulf %17, %18 : vector<1x128xf32>
    %20 = vector.broadcast %19 : vector<1x128xf32> to vector<128x128xf32>
    %21 = arith.subf %3, %20 : vector<128x128xf32>
    %22 = vector.broadcast %10 : vector<128x1xf32> to vector<128x128xf32>
    %23 = arith.mulf %21, %22 : vector<128x128xf32>
    %24 = arith.mulf %23, %23 : vector<128x128xf32>
    %cst_9 = arith.constant dense<0.000000e+00> : vector<128xf32>
    %25 = vector.multi_reduction <add>, %24, %cst_9 [0] : vector<128x128xf32> to vector<128xf32>
    %26 = vector.shape_cast %25 : vector<128xf32> to vector<1x128xf32>
    %27 = vector.broadcast %13 : f32 to vector<1x128xf32>
    %28 = arith.mulf %26, %27 : vector<1x128xf32>
    %c0_10 = arith.constant 0 : index
    %c0_11 = arith.constant 0 : index
    %29 = vector.load %arg4[%c0_10, %c0_11] : memref<1x128xf32, #tpu.memory_space<vmem>>, vector<1x128xf32>
    %30 = vector.broadcast %29 : vector<1x128xf32> to vector<128x128xf32>
    %31 = arith.mulf %30, %23 : vector<128x128xf32>
    %cst_12 = arith.constant 9.99999974E-6 : f32
    %32 = vector.broadcast %cst_12 : f32 to vector<1x128xf32>
    %33 = arith.addf %28, %32 : vector<1x128xf32>
    %34 = math.rsqrt %33 : vector<1x128xf32>
    %35 = vector.broadcast %34 : vector<1x128xf32> to vector<128x128xf32>
    %36 = arith.mulf %31, %35 : vector<128x128xf32>
    %c0_13 = arith.constant 0 : index
    %c0_14 = arith.constant 0 : index
    %37 = vector.load %arg5[%c0_13, %c0_14] : memref<1x128xf32, #tpu.memory_space<vmem>>, vector<1x128xf32>
    %38 = vector.broadcast %37 : vector<1x128xf32> to vector<128x128xf32>
    %39 = arith.addf %36, %38 : vector<128x128xf32>
    %40 = arith.extf %5 : vector<128x128xbf16> to vector<128x128xf32>
    %cst_15 = arith.constant dense<0.000000e+00> : vector<128xf32>
    %41 = vector.multi_reduction <add>, %40, %cst_15 [1] : vector<128x128xf32> to vector<128xf32>
    %42 = vector.shape_cast %41 : vector<128xf32> to vector<128x1xf32>
    %43 = arith.addf %42, %10 : vector<128x1xf32>
    %cst_16 = arith.constant 0.000000e+00 : f32
    %44 = vector.broadcast %cst_16 : f32 to vector<128x1xf32>
    %45 = arith.cmpf ogt, %43, %44 : vector<128x1xf32>
    %46 = math.rsqrt %43 : vector<128x1xf32>
    %cst_17 = arith.constant 0.000000e+00 : f32
    %47 = vector.broadcast %cst_17 : f32 to vector<128x1xf32>
    %48 = arith.select %45, %46, %47 : vector<128x1xi1>, vector<128x1xf32>
    %49 = arith.truncf %39 : vector<128x128xf32> to vector<128x128xbf16>
    %c0_18 = arith.constant 0 : index
    %c0_19 = arith.constant 0 : index
    %50 = vector.load %arg7[%c0_18, %c0_19] : memref<128x128xbf16, #tpu.memory_space<vmem>>, vector<128x128xbf16>
    %cst_20 = arith.constant dense<0.000000e+00> : vector<128x128xf32>
    %51 = tpu.matmul %49, %50, %cst_20 {dimension_numbers = #tpu.dot_dimension_numbers<[1], [0], [0], [1], [0, 0, 1, 1], [], []>} : vector<128x128xbf16>, vector<128x128xbf16>, vector<128x128xf32> -> vector<128x128xf32>
    %52 = vector.broadcast %48 : vector<128x1xf32> to vector<128x128xf32>
    %53 = arith.mulf %52, %51 : vector<128x128xf32>
    %54 = arith.truncf %53 : vector<128x128xf32> to vector<128x128xbf16>
    %cst_21 = arith.constant dense<0.000000e+00> : vector<128x128xf32>
    %55 = tpu.matmul %5, %54, %cst_21 {dimension_numbers = #tpu.dot_dimension_numbers<[1], [0], [0], [1], [0, 0, 1, 1], [], []>} : vector<128x128xbf16>, vector<128x128xbf16>, vector<128x128xf32> -> vector<128x128xf32>
    %56 = vector.broadcast %48 : vector<128x1xf32> to vector<128x128xf32>
    %57 = arith.mulf %56, %51 : vector<128x128xf32>
    %58 = arith.addf %55, %57 : vector<128x128xf32>
    %59 = vector.broadcast %48 : vector<128x1xf32> to vector<128x128xf32>
    %60 = arith.mulf %59, %58 : vector<128x128xf32>
    %c0_22 = arith.constant 0 : index
    %c0_23 = arith.constant 0 : index
    %61 = vector.load %arg8[%c0_22, %c0_23] : memref<1x128xf32, #tpu.memory_space<vmem>>, vector<1x128xf32>
    %62 = vector.broadcast %61 : vector<1x128xf32> to vector<128x128xf32>
    %63 = arith.addf %60, %62 : vector<128x128xf32>
    %cst_24 = arith.constant 0.000000e+00 : f32
    %64 = vector.broadcast %cst_24 : f32 to vector<128x128xf32>
    %65 = arith.cmpf ogt, %63, %64 : vector<128x128xf32>
    %66 = math.exp %63 : vector<128x128xf32>
    %cst_25 = arith.constant 1.000000e+00 : f32
    %67 = vector.broadcast %cst_25 : f32 to vector<128x128xf32>
    %68 = arith.subf %66, %67 : vector<128x128xf32>
    %cst_26 = arith.constant 1.67326319 : f32
    %69 = vector.broadcast %cst_26 : f32 to vector<128x128xf32>
    %70 = arith.mulf %69, %68 : vector<128x128xf32>
    %71 = arith.select %65, %63, %70 : vector<128x128xi1>, vector<128x128xf32>
    %cst_27 = arith.constant 1.05070102 : f32
    %72 = vector.broadcast %cst_27 : f32 to vector<128x128xf32>
    %73 = arith.mulf %72, %71 : vector<128x128xf32>
    %74 = vector.broadcast %10 : vector<128x1xf32> to vector<128x128xf32>
    %75 = arith.mulf %73, %74 : vector<128x128xf32>
    %76 = arith.truncf %75 : vector<128x128xf32> to vector<128x128xbf16>
    %c0_28 = arith.constant 0 : index
    %c0_29 = arith.constant 0 : index
    %77 = vector.load %arg9[%c0_28, %c0_29] : memref<128x128xbf16, #tpu.memory_space<vmem>>, vector<128x128xbf16>
    %cst_30 = arith.constant dense<0.000000e+00> : vector<128x128xf32>
    %78 = tpu.matmul %76, %77, %cst_30 {dimension_numbers = #tpu.dot_dimension_numbers<[1], [0], [0], [1], [0, 0, 1, 1], [], []>} : vector<128x128xbf16>, vector<128x128xbf16>, vector<128x128xf32> -> vector<128x128xf32>
    %c0_31 = arith.constant 0 : index
    %c0_32 = arith.constant 0 : index
    %79 = vector.load %arg10[%c0_31, %c0_32] : memref<1x128xf32, #tpu.memory_space<vmem>>, vector<1x128xf32>
    %80 = vector.broadcast %79 : vector<1x128xf32> to vector<128x128xf32>
    %81 = arith.addf %78, %80 : vector<128x128xf32>
    %cst_33 = arith.constant dense<0xFF800000> : vector<128xf32>
    %82 = vector.multi_reduction <maximumf>, %81, %cst_33 [1] : vector<128x128xf32> to vector<128xf32>
    %83 = vector.shape_cast %82 : vector<128xf32> to vector<128x1xf32>
    %84 = vector.broadcast %83 : vector<128x1xf32> to vector<128x128xf32>
    %85 = arith.subf %81, %84 : vector<128x128xf32>
    %86 = math.exp %85 : vector<128x128xf32>
    %cst_34 = arith.constant dense<0.000000e+00> : vector<128xf32>
    %87 = vector.multi_reduction <add>, %86, %cst_34 [1] : vector<128x128xf32> to vector<128xf32>
    %88 = vector.shape_cast %87 : vector<128xf32> to vector<128x1xf32>
    %89 = tpu.reciprocal %88 {approx = true} : vector<128x1xf32> -> vector<128x1xf32>
    %90 = vector.broadcast %89 : vector<128x1xf32> to vector<128x128xf32>
    %91 = arith.mulf %86, %90 : vector<128x128xf32>
    %92 = vector.broadcast %10 : vector<128x1xf32> to vector<128x128xf32>
    %93 = arith.mulf %91, %92 : vector<128x128xf32>
    %94 = arith.truncf %93 : vector<128x128xf32> to vector<128x128xbf16>
    %95 = tpu.transpose %93, [1, 0] : vector<128x128xf32> -> vector<128x128xf32>
    %96 = vector.extract_strided_slice %95 {offsets = [0, 0], sizes = [8, 128], strides = [1, 1]} : vector<128x128xf32> to vector<8x128xf32>
    %97 = arith.truncf %96 : vector<8x128xf32> to vector<8x128xbf16>
    %cst_35 = arith.constant dense<0.000000e+00> : vector<8x128xf32>
    %98 = tpu.matmul %97, %76, %cst_35 {dimension_numbers = #tpu.dot_dimension_numbers<[1], [0], [0], [1], [0, 0, 1, 1], [], []>} : vector<8x128xbf16>, vector<128x128xbf16>, vector<8x128xf32> -> vector<8x128xf32>
    %cst_36 = arith.constant 0.000000e+00 : f32
    %99 = vector.broadcast %cst_36 : f32 to vector<8x128xf32>
    %100 = arith.cmpf ogt, %98, %99 : vector<8x128xf32>
    %101 = math.exp %98 : vector<8x128xf32>
    %cst_37 = arith.constant 1.000000e+00 : f32
    %102 = vector.broadcast %cst_37 : f32 to vector<8x128xf32>
    %103 = arith.subf %101, %102 : vector<8x128xf32>
    %cst_38 = arith.constant 1.67326319 : f32
    %104 = vector.broadcast %cst_38 : f32 to vector<8x128xf32>
    %105 = arith.mulf %104, %103 : vector<8x128xf32>
    %106 = arith.select %100, %98, %105 : vector<8x128xi1>, vector<8x128xf32>
    %cst_39 = arith.constant 1.05070102 : f32
    %107 = vector.broadcast %cst_39 : f32 to vector<8x128xf32>
    %108 = arith.mulf %107, %106 : vector<8x128xf32>
    %cst_40 = arith.constant dense<0xFF800000> : vector<8xf32>
    %109 = vector.multi_reduction <maximumf>, %108, %cst_40 [1] : vector<8x128xf32> to vector<8xf32>
    %110 = vector.shape_cast %109 : vector<8xf32> to vector<8x1xf32>
    %111 = vector.broadcast %110 : vector<8x1xf32> to vector<8x128xf32>
    %112 = arith.subf %108, %111 : vector<8x128xf32>
    %113 = math.exp %112 : vector<8x128xf32>
    %cst_41 = arith.constant dense<0.000000e+00> : vector<8xf32>
    %114 = vector.multi_reduction <add>, %113, %cst_41 [1] : vector<8x128xf32> to vector<8xf32>
    %115 = vector.shape_cast %114 : vector<8xf32> to vector<8x1xf32>
    %116 = math.log %115 : vector<8x1xf32>
    %117 = vector.broadcast %116 : vector<8x1xf32> to vector<8x128xf32>
    %118 = arith.subf %112, %117 : vector<8x128xf32>
    %c0_42 = arith.constant 0 : index
    %c0_43 = arith.constant 0 : index
    %c0_44 = arith.constant 0 : index
    %119 = vector.load %arg12[%c0_42, %c0_43, %c0_44] : memref<1x8x128xf32, #tpu.memory_space<vmem>>, vector<1x8x128xf32>
    %120 = vector.shape_cast %119 : vector<1x8x128xf32> to vector<8x128xf32>
    %121 = vector.shape_cast %118 : vector<8x128xf32> to vector<1x8x128xf32>
    tpu.vector_store %arg12[%c0_42, %c0_43, %c0_44], %121 {strides = array<i32>} : memref<1x8x128xf32, #tpu.memory_space<vmem>>, vector<1x8x128xf32>,
    %c0_45 = arith.constant 0 : index
    %c0_46 = arith.constant 0 : index
    %c0_47 = arith.constant 0 : index
    %122 = vector.load %arg11[%c0_45, %c0_46, %c0_47] : memref<1x8x128xf32, #tpu.memory_space<vmem>>, vector<1x8x128xf32>
    %123 = vector.shape_cast %122 : vector<1x8x128xf32> to vector<8x128xf32>
    %124 = vector.shape_cast %96 : vector<8x128xf32> to vector<1x8x128xf32>
    tpu.vector_store %arg11[%c0_45, %c0_46, %c0_47], %124 {strides = array<i32>} : memref<1x8x128xf32, #tpu.memory_space<vmem>>, vector<1x8x128xf32>,
    %cst_48 = arith.constant dense<0.000000e+00> : vector<128x128xf32>
    %125 = tpu.matmul %5, %94, %cst_48 {dimension_numbers = #tpu.dot_dimension_numbers<[1], [0], [0], [1], [0, 0, 1, 1], [], []>} : vector<128x128xbf16>, vector<128x128xbf16>, vector<128x128xf32> -> vector<128x128xf32>
    %126 = arith.mulf %93, %125 : vector<128x128xf32>
    %127 = vector.shape_cast %126 : vector<128x128xf32> to vector<1x128x128xf32>
    %cst_49 = arith.constant dense<0.000000e+00> : vector<1xf32>
    %128 = vector.multi_reduction <add>, %127, %cst_49 [1, 2] : vector<1x128x128xf32> to vector<1xf32>
    %129 = vector.shape_cast %128 : vector<1xf32> to vector<1x1x1xf32>
    %130 = vector.extract %129[0, 0, 0] : f32 from vector<1x1x1xf32>
    %131 = vector.broadcast %130 : f32 to vector<1x1xf32>
    %cst_50 = arith.constant dense<0.000000e+00> : vector<128xf32>
    %132 = vector.multi_reduction <add>, %125, %cst_50 [0] : vector<128x128xf32> to vector<128xf32>
    %133 = vector.shape_cast %132 : vector<128xf32> to vector<1x128xf32>
    %134 = arith.subf %43, %10 : vector<128x1xf32>
    %135 = vector.shape_cast %134 : vector<128x1xf32> to vector<1x128x1xf32>
    %cst_51 = arith.constant dense<0.000000e+00> : vector<1xf32>
    %136 = vector.multi_reduction <add>, %135, %cst_51 [1, 2] : vector<1x128x1xf32> to vector<1xf32>
    %137 = vector.shape_cast %136 : vector<1xf32> to vector<1x1x1xf32>
    %138 = vector.extract %137[0, 0, 0] : f32 from vector<1x1x1xf32>
    %139 = vector.broadcast %138 : f32 to vector<1x1xf32>
    %140 = arith.mulf %133, %133 : vector<1x128xf32>
    %141 = vector.shape_cast %140 : vector<1x128xf32> to vector<1x1x128xf32>
    %cst_52 = arith.constant dense<0.000000e+00> : vector<1xf32>
    %142 = vector.multi_reduction <add>, %141, %cst_52 [1, 2] : vector<1x1x128xf32> to vector<1xf32>
    %143 = vector.shape_cast %142 : vector<1xf32> to vector<1x1x1xf32>
    %144 = vector.extract %143[0, 0, 0] : f32 from vector<1x1x1xf32>
    %145 = vector.broadcast %144 : f32 to vector<1x1xf32>
    %146 = arith.divf %145, %139 : vector<1x1xf32>
    %147 = arith.subf %131, %146 : vector<1x1xf32>
    %cst_53 = arith.constant 0.000000e+00 : f32
    %148 = vector.broadcast %cst_53 : f32 to vector<1x1xf32>
    %149 = arith.subf %148, %147 : vector<1x1xf32>
    %150 = arith.divf %149, %139 : vector<1x1xf32>
    %cst_54 = arith.constant dense<0.000000e+00> : vector<8x128xf32>
    %151 = tpu.matmul %97, %94, %cst_54 {dimension_numbers = #tpu.dot_dimension_numbers<[1], [0], [0], [1], [0, 0, 1, 1], [], []>} : vector<8x128xbf16>, vector<128x128xbf16>, vector<8x128xf32> -> vector<8x128xf32>
    %152 = arith.mulf %151, %151 : vector<8x128xf32>
    %153 = vector.shape_cast %152 : vector<8x128xf32> to vector<1x8x128xf32>
    %cst_55 = arith.constant dense<0.000000e+00> : vector<1xf32>
    %154 = vector.multi_reduction <add>, %153, %cst_55 [1, 2] : vector<1x8x128xf32> to vector<1xf32>
    %155 = vector.shape_cast %154 : vector<1xf32> to vector<1x1x1xf32>
    %156 = vector.extract %155[0, 0, 0] : f32 from vector<1x1x1xf32>
    %157 = vector.broadcast %156 : f32 to vector<1x1xf32>
    %158 = math.sqrt %157 : vector<1x1xf32>
    %159 = arith.mulf %93, %93 : vector<128x128xf32>
    %160 = vector.shape_cast %159 : vector<128x128xf32> to vector<1x128x128xf32>
    %cst_56 = arith.constant dense<0.000000e+00> : vector<1xf32>
    %161 = vector.multi_reduction <add>, %160, %cst_56 [1, 2] : vector<1x128x128xf32> to vector<1xf32>
    %162 = vector.shape_cast %161 : vector<1xf32> to vector<1x1x1xf32>
    %163 = vector.extract %162[0, 0, 0] : f32 from vector<1x1x1xf32>
    %164 = vector.broadcast %163 : f32 to vector<1x1xf32>
    %cst_57 = arith.constant 2.000000e+00 : f32
    %165 = vector.broadcast %cst_57 : f32 to vector<1x1xf32>
    %166 = arith.mulf %165, %164 : vector<1x1xf32>
    %cst_58 = arith.constant 5.000000e-01 : f32
    %167 = vector.broadcast %cst_58 : f32 to vector<1x1xf32>
    %168 = arith.mulf %166, %167 : vector<1x1xf32>
    %169 = arith.divf %168, %158 : vector<1x1xf32>
    %cst_59 = arith.constant 2.000000e+00 : f32
    %170 = vector.broadcast %cst_59 : f32 to vector<1x1xf32>
    %171 = arith.subf %170, %169 : vector<1x1xf32>
    %cst_60 = arith.constant 0.000000e+00 : f32
    %172 = vector.broadcast %cst_60 : f32 to vector<1x1xf32>
    %173 = arith.maximumf %171, %172 : vector<1x1xf32>
    %174 = math.sqrt %173 : vector<1x1xf32>
    %cst_61 = arith.constant dense<0.000000e+00> : vector<128xf32>
    %175 = vector.multi_reduction <add>, %93, %cst_61 [0] : vector<128x128xf32> to vector<128xf32>
    %176 = vector.shape_cast %175 : vector<128xf32> to vector<1x128xf32>
    %177 = arith.mulf %176, %176 : vector<1x128xf32>
    %178 = vector.shape_cast %177 : vector<1x128xf32> to vector<1x1x128xf32>
    %cst_62 = arith.constant dense<0.000000e+00> : vector<1xf32>
    %179 = vector.multi_reduction <add>, %178, %cst_62 [1, 2] : vector<1x1x128xf32> to vector<1xf32>
    %180 = vector.shape_cast %179 : vector<1xf32> to vector<1x1x1xf32>
    %181 = vector.extract %180[0, 0, 0] : f32 from vector<1x1x1xf32>
    %182 = vector.broadcast %181 : f32 to vector<1x1xf32>
    %183 = math.sqrt %182 : vector<1x1xf32>
    %184 = tpu.iota {dimensions = array<i32: 2>} : vector<1x1x128xi32>
    %c0_i32 = arith.constant 0 : i32
    %185 = vector.broadcast %c0_i32 : i32 to vector<1x1x128xi32>
    %186 = arith.cmpi eq, %184, %185 : vector<1x1x128xi32>
    %c1_i32 = arith.constant 1 : i32
    %187 = vector.broadcast %c1_i32 : i32 to vector<1x1x128xi32>
    %188 = arith.cmpi eq, %184, %187 : vector<1x1x128xi32>
    %c2_i32 = arith.constant 2 : i32
    %189 = vector.broadcast %c2_i32 : i32 to vector<1x1x128xi32>
    %190 = arith.cmpi eq, %184, %189 : vector<1x1x128xi32>
    %cst_63 = arith.constant 0.000000e+00 : f32
    %191 = vector.shape_cast %183 : vector<1x1xf32> to vector<1x1x1xf32>
    %192 = vector.broadcast %191 : vector<1x1x1xf32> to vector<1x1x128xf32>
    %193 = vector.broadcast %cst_63 : f32 to vector<1x1x128xf32>
    %194 = arith.select %190, %192, %193 : vector<1x1x128xi1>, vector<1x1x128xf32>
    %195 = vector.shape_cast %174 : vector<1x1xf32> to vector<1x1x1xf32>
    %196 = vector.broadcast %195 : vector<1x1x1xf32> to vector<1x1x128xf32>
    %197 = arith.select %188, %196, %194 : vector<1x1x128xi1>, vector<1x1x128xf32>
    %198 = vector.shape_cast %150 : vector<1x1xf32> to vector<1x1x1xf32>
    %199 = vector.broadcast %198 : vector<1x1x1xf32> to vector<1x1x128xf32>
    %200 = arith.select %186, %199, %197 : vector<1x1x128xi1>, vector<1x1x128xf32>
    %c0_64 = arith.constant 0 : index
    %c0_65 = arith.constant 0 : index
    %c0_66 = arith.constant 0 : index
    %201 = vector.load %arg13[%c0_64, %c0_65, %c0_66] : memref<1x1x128xf32, #tpu.memory_space<vmem>>, vector<1x1x128xf32>
    tpu.vector_store %arg13[%c0_64, %c0_65, %c0_66], %200 {strides = array<i32>} : memref<1x1x128xf32, #tpu.memory_space<vmem>>, vector<1x1x128xf32>,
    return
  }
  func.func @transform_0(%arg0: i32, %arg1: memref<2xi32, #tpu.memory_space<smem>>) -> (i32, i32, i32) {
    %c0_i32 = arith.constant 0 : i32
    %c0_i32_0 = arith.constant 0 : i32
    %c0_i32_1 = arith.constant 0 : i32
    return %arg0, %c0_i32, %c0_i32_0 : i32, i32, i32
  }
  func.func @transform_1(%arg0: i32, %arg1: memref<2xi32, #tpu.memory_space<smem>>) -> (i32, i32, i32) {
    %c0_i32 = arith.constant 0 : i32
    %c0_i32_0 = arith.constant 0 : i32
    %c0_i32_1 = arith.constant 0 : i32
    return %arg0, %c0_i32, %c0_i32_0 : i32, i32, i32
  }
  func.func @transform_2(%arg0: i32, %arg1: memref<2xi32, #tpu.memory_space<smem>>) -> (i32, i32) {
    %c0_i32 = arith.constant 0 : i32
    %c0_i32_0 = arith.constant 0 : i32
    %c0_i32_1 = arith.constant 0 : i32
    return %c0_i32, %c0_i32_0 : i32, i32
  }
  func.func @transform_3(%arg0: i32, %arg1: memref<2xi32, #tpu.memory_space<smem>>) -> (i32, i32) {
    %c0_i32 = arith.constant 0 : i32
    %c0_i32_0 = arith.constant 0 : i32
    %c0_i32_1 = arith.constant 0 : i32
    return %c0_i32, %c0_i32_0 : i32, i32
  }
  func.func @transform_4(%arg0: i32, %arg1: memref<2xi32, #tpu.memory_space<smem>>) -> (i32, i32) {
    %c0_i32 = arith.constant 0 : i32
    %c0_i32_0 = arith.constant 0 : i32
    %c0_i32_1 = arith.constant 0 : i32
    return %c0_i32, %c0_i32_0 : i32, i32
  }
  func.func @transform_5(%arg0: i32, %arg1: memref<2xi32, #tpu.memory_space<smem>>) -> (i32, i32) {
    %c0_i32 = arith.constant 0 : i32
    %c0_i32_0 = arith.constant 0 : i32
    %c0_i32_1 = arith.constant 0 : i32
    return %c0_i32, %c0_i32_0 : i32, i32
  }
  func.func @transform_6(%arg0: i32, %arg1: memref<2xi32, #tpu.memory_space<smem>>) -> (i32, i32) {
    %c0_i32 = arith.constant 0 : i32
    %c0_i32_0 = arith.constant 0 : i32
    %c0_i32_1 = arith.constant 0 : i32
    return %c0_i32, %c0_i32_0 : i32, i32
  }
  func.func @transform_7(%arg0: i32, %arg1: memref<2xi32, #tpu.memory_space<smem>>) -> (i32, i32) {
    %c0_i32 = arith.constant 0 : i32
    %c0_i32_0 = arith.constant 0 : i32
    %c0_i32_1 = arith.constant 0 : i32
    return %c0_i32, %c0_i32_0 : i32, i32
  }
  func.func @transform_8(%arg0: i32, %arg1: memref<2xi32, #tpu.memory_space<smem>>) -> (i32, i32) {
    %c0_i32 = arith.constant 0 : i32
    %c0_i32_0 = arith.constant 0 : i32
    %c0_i32_1 = arith.constant 0 : i32
    return %c0_i32, %c0_i32_0 : i32, i32
  }
  func.func @transform_9(%arg0: i32, %arg1: memref<2xi32, #tpu.memory_space<smem>>) -> (i32, i32, i32) {
    %c0_i32 = arith.constant 0 : i32
    %c0_i32_0 = arith.constant 0 : i32
    %c0_i32_1 = arith.constant 0 : i32
    return %arg0, %c0_i32, %c0_i32_0 : i32, i32, i32
  }
  func.func @transform_10(%arg0: i32, %arg1: memref<2xi32, #tpu.memory_space<smem>>) -> (i32, i32, i32) {
    %c0_i32 = arith.constant 0 : i32
    %c0_i32_0 = arith.constant 0 : i32
    %c0_i32_1 = arith.constant 0 : i32
    return %arg0, %c0_i32, %c0_i32_0 : i32, i32, i32
  }
  func.func @transform_11(%arg0: i32, %arg1: memref<2xi32, #tpu.memory_space<smem>>) -> (i32, i32, i32) {
    %c0_i32 = arith.constant 0 : i32
    %c0_i32_0 = arith.constant 0 : i32
    %c0_i32_1 = arith.constant 0 : i32
    return %arg0, %c0_i32, %c0_i32_0 : i32, i32, i32
  }
}

</mosaic_0001>

<llo_original>
// kernel: tpu_custom_call.1
$region0: #{tpu_custom_call.1}
  #allocation0 [shape = 'u32[]', space=smem, size = 0x4, offset = 0x4, fixed_abs, tag = 'smem constant byte address 0x4 - core index']
  #allocation1 [shape = 'u32[72,128]{1,0:T(1,128)}', space=vmem, size = 0x9000, scoped, tag = 'internal scratch']
  #allocation2 [shape = 's32[1]{0}', space=sflag, size = 0x4, scoped, tag = 'scoped memory for tpu_custom_call.1']
  #allocation3 [shape = 'u8[512]{0}', space=smem, size = 0x200, scoped, tag = 'prefetched SMEM operand 0']
  %s0 = inlined_call_operand.hbm [shape: s32[2], index: 0, kind: input, shape index: {}]
  %s1 = inlined_call_operand.hbm [shape: f32[2,128,128], index: 1, kind: input, shape index: {}]
  %s2 = inlined_call_operand.hbm [shape: bf16[2,128,128], index: 2, kind: input, shape index: {}]
  %s3 = inlined_call_operand.vmem [shape: f32[1,128], index: 3, kind: input, shape index: {}]
  %s4 = inlined_call_operand.vmem [shape: f32[1,128], index: 4, kind: input, shape index: {}]
  %s5 = inlined_call_operand.vmem [shape: f32[1,128], index: 5, kind: input, shape index: {}]
  %s6 = inlined_call_operand.hbm [shape: bf16[128,128], index: 6, kind: input, shape index: {}]
  %s7 = inlined_call_operand.vmem [shape: f32[1,128], index: 7, kind: input, shape index: {}]
  %s8 = inlined_call_operand.hbm [shape: bf16[128,128], index: 8, kind: input, shape index: {}]
  %s9 = inlined_call_operand.vmem [shape: f32[1,128], index: 9, kind: input, shape index: {}]
  %s10 = inlined_call_operand.hbm [shape: f32[2,8,128], index: 10, kind: output, shape index: {0}]
  %s11 = inlined_call_operand.hbm [shape: f32[2,8,128], index: 11, kind: output, shape index: {1}]
  %s12 = inlined_call_operand.hbm [shape: f32[2,1,128], index: 12, kind: output, shape index: {2}]
  %13 = xla_tuple %s10, %s11, %s12
  %s14 = sld [smem:[#allocation0]]
  $region101: #{tpu_custom_call.1} parent=0
    _
  %s16 = ssub.s32 1, %s14
  %s17 = scalar_select 0, %s16, %s14
  %s19 = sshll.u32 %s0, 4
  %s20 = int_to_ptr.hbm [resolvable:$true] %s19
  %22 = dma.hbm_to_smem %s20, 16, [#allocation3], [#allocation2]
  %24 = dma.done [#allocation2], 16
  %25 = sfence
  $region1: #{tpu_custom_call.1} parent=0
    #allocation4 [shape = 'u8[131072]{0}', space=vmem, size = 0x20000, scoped, tag = 'input window, operand 1']
    #allocation5 [shape = 's32[2]{0}', space=sflag, size = 0x8, scoped, tag = 'scoped memory for tpu_custom_call.1']
    #allocation6 [shape = 's32[2]{0}', space=sflag, size = 0x8, scoped, tag = 'scoped memory for tpu_custom_call.1']
    #allocation7 [shape = 'u8[65536]{0}', space=vmem, size = 0x10000, scoped, tag = 'input window, operand 2']
    #allocation8 [shape = 's32[2]{0}', space=sflag, size = 0x8, scoped, tag = 'scoped memory for tpu_custom_call.1']
    #allocation9 [shape = 'u8[32768]{0}', space=vmem, size = 0x8000, scoped, tag = 'input window, operand 6, single buffered']
    #allocation10 [shape = 'u8[32768]{0}', space=vmem, size = 0x8000, scoped, tag = 'input window, operand 8, single buffered']
    #allocation11 [shape = 's32[1]{0}', space=sflag, size = 0x4, scoped, tag = 'scoped memory for tpu_custom_call.1']
    #allocation12 [shape = 'u8[8192]{0}', space=vmem, size = 0x2000, scoped, tag = 'output window, operand 0']
    #allocation13 [shape = 'u8[8192]{0}', space=vmem, size = 0x2000, scoped, tag = 'output window, operand 1']
    #allocation14 [shape = 's32[2]{0}', space=sflag, size = 0x8, scoped, tag = 'scoped memory for tpu_custom_call.1']
    #allocation15 [shape = 'u8[1024]{0}', space=vmem, size = 0x400, scoped, tag = 'output window, operand 2']
    %26 = vsyncpa [#allocation5], 0
    %s27 = scalar_lea.sflag [#allocation5], 1
    %28 = vsyncpa %s27, 0
    %29 = vsyncpa [#allocation8], 0
    %s30 = scalar_lea.sflag [#allocation8], 1
    %31 = vsyncpa %s30, 0
    %32 = vsyncpa [#allocation11], 0
    %33 = vsyncpa [#allocation6], 0
    %s34 = scalar_lea.sflag [#allocation6], 1
    %35 = vsyncpa %s34, 0
    %36 = vsyncpa [#allocation14], 0
    %s37 = scalar_lea.sflag [#allocation14], 1
    %38 = vsyncpa %s37, 0
    loop: start=0, step=1, limit=4
    $region2: #{tpu_custom_call.1} parent=1 // loop_pre_header
      _
    $region3: #{tpu_custom_call.1} parent=1 // loop_header
      %s40 = sphi 0, %s44
      %p41 = scmp.ge.s32.totalorder %s40, 4
      %s50 = sphi 0, %s52
      %s53 = sphi 0, %s50
      %s54 = sphi 0, %s53
      %s70 = sphi 0, %s54
      %s76 = sphi 0, %s78
      %s79 = sphi 0, %s76
      %s80 = sphi 0, %s79
      %s96 = sphi 0, %s80
      %s100 = sphi 0, %s100
      %s102 = sphi 0, %s100
      %s103 = sphi 0, %s102
      %s117 = sphi 0, %s103
      %s121 = sphi 0, %s121
      %s123 = sphi 0, %s121
      %s124 = sphi 0, %s123
      %s138 = sphi 0, %s124
      %s142 = sphi 0, %s142
      %s144 = sphi 0, %s142
      %s145 = sphi 0, %s144
      %s159 = sphi 0, %s145
      %s163 = sphi 0, %s163
      %s165 = sphi 0, %s163
      %s166 = sphi 0, %s165
      %s180 = sphi 0, %s166
      %s184 = sphi 0, %s184
      %s186 = sphi 0, %s184
      %s187 = sphi 0, %s186
      %s201 = sphi 0, %s187
      %s205 = sphi 0, %s205
      %s207 = sphi 0, %s205
      %s208 = sphi 0, %s207
      %s222 = sphi 0, %s208
      %s226 = sphi 0, %s226
      %s228 = sphi 0, %s226
      %s229 = sphi 0, %s228
      %s243 = sphi 0, %s229
      %s249 = sphi 0, %s251
      %s252 = sphi 0, %s249
      %s253 = sphi 0, %s252
      %s269 = sphi 0, %s253
      %s275 = sphi 0, %s277
      %s278 = sphi 0, %s275
      %s279 = sphi 0, %s278
      %s295 = sphi 0, %s279
      %s301 = sphi 0, %s303
      %s304 = sphi 0, %s301
      %s305 = sphi 0, %s304
      %s321 = sphi 0, %s305
    $region4: #{tpu_custom_call.1} parent=1 // loop_header_branch
      %43 = sbr.rel (%p41) target = $region8
    $region5: #{tpu_custom_call.1} parent=1 // loop_body
      %s45 = ssub.s32 %s40, 1
      %s46 = ssub.s32 %s40, 2
      %s47 = sadd.s32 %s40, 1
      %s48 = ssub.s32 %s40, %s47
      %p49 = scmp.eq.s32.totalorder %s48, 0
      %s51 = sadd.s32 %s50, 1
      %s52 = scalar_select %p49, %s50, %s51
      %p55 = pneg %p49
      %p56 = scmp.eq.s32.totalorder %s40, 1
      %p57 = por %p55, %p56
      %p58 = scmp.ne.s32.totalorder %s50, %s53
      %p59 = scmp.eq.s32.totalorder %s40, 0
      %p60 = por %p58, %p59
      %p61 = scmp.ne.s32.totalorder %s50, %s53
      %p62 = scmp.eq.s32.totalorder %s45, 1
      %p63 = por %p61, %p62
      %p64 = scmp.ne.s32.totalorder %s53, %s54
      %p65 = scmp.eq.s32.totalorder %s45, 0
      %p66 = por %p64, %p65
      %p67 = scmp.ne.s32.totalorder %s53, %s54
      %p68 = scmp.eq.s32.totalorder %s46, 1
      %p69 = por %p67, %p68
      %p71 = scmp.ne.s32.totalorder %s54, %s70
      %p72 = scmp.eq.s32.totalorder %s46, 0
      %p73 = por %p71, %p72
      %s74 = ssub.s32 %s40, %s47
      %p75 = scmp.eq.s32.totalorder %s74, 0
      %s77 = sadd.s32 %s76, 1
      %s78 = scalar_select %p75, %s76, %s77
      %p81 = pneg %p75
      %p82 = scmp.eq.s32.totalorder %s40, 1
      %p83 = por %p81, %p82
      %p84 = scmp.ne.s32.totalorder %s76, %s79
      %p85 = scmp.eq.s32.totalorder %s40, 0
      %p86 = por %p84, %p85
      %p87 = scmp.ne.s32.totalorder %s76, %s79
      %p88 = scmp.eq.s32.totalorder %s45, 1
      %p89 = por %p87, %p88
      %p90 = scmp.ne.s32.totalorder %s79, %s80
      %p91 = scmp.eq.s32.totalorder %s45, 0
      %p92 = por %p90, %p91
      %p93 = scmp.ne.s32.totalorder %s79, %s80
      %p94 = scmp.eq.s32.totalorder %s46, 1
      %p95 = por %p93, %p94
      %p97 = scmp.ne.s32.totalorder %s80, %s96
      %p98 = scmp.eq.s32.totalorder %s46, 0
      %p99 = por %p97, %p98
      %s101 = sadd.s32 %s100, 1
      %p104 = scmp.eq.s32.totalorder %s40, 1
      %p105 = scmp.ne.s32.totalorder %s100, %s102
      %p106 = scmp.eq.s32.totalorder %s40, 0
      %p107 = por %p105, %p106
      %p108 = scmp.ne.s32.totalorder %s100, %s102
      %p109 = scmp.eq.s32.totalorder %s45, 1
      %p110 = por %p108, %p109
      %p111 = scmp.ne.s32.totalorder %s102, %s103
      %p112 = scmp.eq.s32.totalorder %s45, 0
      %p113 = por %p111, %p112
      %p114 = scmp.ne.s32.totalorder %s102, %s103
      %p115 = scmp.eq.s32.totalorder %s46, 1
      %p116 = por %p114, %p115
      %p118 = scmp.ne.s32.totalorder %s103, %s117
      %p119 = scmp.eq.s32.totalorder %s46, 0
      %p120 = por %p118, %p119
      %s122 = sadd.s32 %s121, 1
      %p125 = scmp.eq.s32.totalorder %s40, 1
      %p126 = scmp.ne.s32.totalorder %s121, %s123
      %p127 = scmp.eq.s32.totalorder %s40, 0
      %p128 = por %p126, %p127
      %p129 = scmp.ne.s32.totalorder %s121, %s123
      %p130 = scmp.eq.s32.totalorder %s45, 1
      %p131 = por %p129, %p130
      %p132 = scmp.ne.s32.totalorder %s123, %s124
      %p133 = scmp.eq.s32.totalorder %s45, 0
      %p134 = por %p132, %p133
      %p135 = scmp.ne.s32.totalorder %s123, %s124
      %p136 = scmp.eq.s32.totalorder %s46, 1
      %p137 = por %p135, %p136
      %p139 = scmp.ne.s32.totalorder %s124, %s138
      %p140 = scmp.eq.s32.totalorder %s46, 0
      %p141 = por %p139, %p140
      %s143 = sadd.s32 %s142, 1
      %p146 = scmp.eq.s32.totalorder %s40, 1
      %p147 = scmp.ne.s32.totalorder %s142, %s144
      %p148 = scmp.eq.s32.totalorder %s40, 0
      %p149 = por %p147, %p148
      %p150 = scmp.ne.s32.totalorder %s142, %s144
      %p151 = scmp.eq.s32.totalorder %s45, 1
      %p152 = por %p150, %p151
      %p153 = scmp.ne.s32.totalorder %s144, %s145
      %p154 = scmp.eq.s32.totalorder %s45, 0
      %p155 = por %p153, %p154
      %p156 = scmp.ne.s32.totalorder %s144, %s145
      %p157 = scmp.eq.s32.totalorder %s46, 1
      %p158 = por %p156, %p157
      %p160 = scmp.ne.s32.totalorder %s145, %s159
      %p161 = scmp.eq.s32.totalorder %s46, 0
      %p162 = por %p160, %p161
      %s164 = sadd.s32 %s163, 1
      %p167 = scmp.eq.s32.totalorder %s40, 1
      %p168 = scmp.ne.s32.totalorder %s163, %s165
      %p169 = scmp.eq.s32.totalorder %s40, 0
      %p170 = por %p168, %p169
      %p171 = scmp.ne.s32.totalorder %s163, %s165
      %p172 = scmp.eq.s32.totalorder %s45, 1
      %p173 = por %p171, %p172
      %p174 = scmp.ne.s32.totalorder %s165, %s166
      %p175 = scmp.eq.s32.totalorder %s45, 0
      %p176 = por %p174, %p175
      %p177 = scmp.ne.s32.totalorder %s165, %s166
      %p178 = scmp.eq.s32.totalorder %s46, 1
      %p179 = por %p177, %p178
      %p181 = scmp.ne.s32.totalorder %s166, %s180
      %p182 = scmp.eq.s32.totalorder %s46, 0
      %p183 = por %p181, %p182
      %s185 = sadd.s32 %s184, 1
      %p188 = scmp.eq.s32.totalorder %s40, 1
      %p189 = scmp.ne.s32.totalorder %s184, %s186
      %p190 = scmp.eq.s32.totalorder %s40, 0
      %p191 = por %p189, %p190
      %p192 = scmp.ne.s32.totalorder %s184, %s186
      %p193 = scmp.eq.s32.totalorder %s45, 1
      %p194 = por %p192, %p193
      %p195 = scmp.ne.s32.totalorder %s186, %s187
      %p196 = scmp.eq.s32.totalorder %s45, 0
      %p197 = por %p195, %p196
      %p198 = scmp.ne.s32.totalorder %s186, %s187
      %p199 = scmp.eq.s32.totalorder %s46, 1
      %p200 = por %p198, %p199
      %p202 = scmp.ne.s32.totalorder %s187, %s201
      %p203 = scmp.eq.s32.totalorder %s46, 0
      %p204 = por %p202, %p203
      %s206 = sadd.s32 %s205, 1
      %p209 = scmp.eq.s32.totalorder %s40, 1
      %p210 = scmp.ne.s32.totalorder %s205, %s207
      %p211 = scmp.eq.s32.totalorder %s40, 0
      %p212 = por %p210, %p211
      %p213 = scmp.ne.s32.totalorder %s205, %s207
      %p214 = scmp.eq.s32.totalorder %s45, 1
      %p215 = por %p213, %p214
      %p216 = scmp.ne.s32.totalorder %s207, %s208
      %p217 = scmp.eq.s32.totalorder %s45, 0
      %p218 = por %p216, %p217
      %p219 = scmp.ne.s32.totalorder %s207, %s208
      %p220 = scmp.eq.s32.totalorder %s46, 1
      %p221 = por %p219, %p220
      %p223 = scmp.ne.s32.totalorder %s208, %s222
      %p224 = scmp.eq.s32.totalorder %s46, 0
      %p225 = por %p223, %p224
      %s227 = sadd.s32 %s226, 1
      %p230 = scmp.eq.s32.totalorder %s40, 1
      %p231 = scmp.ne.s32.totalorder %s226, %s228
      %p232 = scmp.eq.s32.totalorder %s40, 0
      %p233 = por %p231, %p232
      %p234 = scmp.ne.s32.totalorder %s226, %s228
      %p235 = scmp.eq.s32.totalorder %s45, 1
      %p236 = por %p234, %p235
      %p237 = scmp.ne.s32.totalorder %s228, %s229
      %p238 = scmp.eq.s32.totalorder %s45, 0
      %p239 = por %p237, %p238
      %p240 = scmp.ne.s32.totalorder %s228, %s229
      %p241 = scmp.eq.s32.totalorder %s46, 1
      %p242 = por %p240, %p241
      %p244 = scmp.ne.s32.totalorder %s229, %s243
      %p245 = scmp.eq.s32.totalorder %s46, 0
      %p246 = por %p244, %p245
      %s247 = ssub.s32 %s40, %s47
      %p248 = scmp.eq.s32.totalorder %s247, 0
      %s250 = sadd.s32 %s249, 1
      %s251 = scalar_select %p248, %s249, %s250
      %p254 = pneg %p248
      %p255 = scmp.eq.s32.totalorder %s40, 1
      %p256 = por %p254, %p255
      %p257 = scmp.ne.s32.totalorder %s249, %s252
      %p258 = scmp.eq.s32.totalorder %s40, 0
      %p259 = por %p257, %p258
      %p260 = scmp.ne.s32.totalorder %s249, %s252
      %p261 = scmp.eq.s32.totalorder %s45, 1
      %p262 = por %p260, %p261
      %p263 = scmp.ne.s32.totalorder %s252, %s253
      %p264 = scmp.eq.s32.totalorder %s45, 0
      %p265 = por %p263, %p264
      %p266 = scmp.ne.s32.totalorder %s252, %s253
      %p267 = scmp.eq.s32.totalorder %s46, 1
      %p268 = por %p266, %p267
      %p270 = scmp.ne.s32.totalorder %s253, %s269
      %p271 = scmp.eq.s32.totalorder %s46, 0
      %p272 = por %p270, %p271
      %s273 = ssub.s32 %s40, %s47
      %p274 = scmp.eq.s32.totalorder %s273, 0
      %s276 = sadd.s32 %s275, 1
      %s277 = scalar_select %p274, %s275, %s276
      %p280 = pneg %p274
      %p281 = scmp.eq.s32.totalorder %s40, 1
      %p282 = por %p280, %p281
      %p283 = scmp.ne.s32.totalorder %s275, %s278
      %p284 = scmp.eq.s32.totalorder %s40, 0
      %p285 = por %p283, %p284
      %p286 = scmp.ne.s32.totalorder %s275, %s278
      %p287 = scmp.eq.s32.totalorder %s45, 1
      %p288 = por %p286, %p287
      %p289 = scmp.ne.s32.totalorder %s278, %s279
      %p290 = scmp.eq.s32.totalorder %s45, 0
      %p291 = por %p289, %p290
      %p292 = scmp.ne.s32.totalorder %s278, %s279
      %p293 = scmp.eq.s32.totalorder %s46, 1
      %p294 = por %p292, %p293
      %p296 = scmp.ne.s32.totalorder %s279, %s295
      %p297 = scmp.eq.s32.totalorder %s46, 0
      %p298 = por %p296, %p297
      %s299 = ssub.s32 %s40, %s47
      %p300 = scmp.eq.s32.totalorder %s299, 0
      %s302 = sadd.s32 %s301, 1
      %s303 = scalar_select %p300, %s301, %s302
      %p306 = pneg %p300
      %p307 = scmp.eq.s32.totalorder %s40, 1
      %p308 = por %p306, %p307
      %p309 = scmp.ne.s32.totalorder %s301, %s304
      %p310 = scmp.eq.s32.totalorder %s40, 0
      %p311 = por %p309, %p310
      %p312 = scmp.ne.s32.totalorder %s301, %s304
      %p313 = scmp.eq.s32.totalorder %s45, 1
      %p314 = por %p312, %p313
      %p315 = scmp.ne.s32.totalorder %s304, %s305
      %p316 = scmp.eq.s32.totalorder %s45, 0
      %p317 = por %p315, %p316
      %p318 = scmp.ne.s32.totalorder %s304, %s305
      %p319 = scmp.eq.s32.totalorder %s46, 1
      %p320 = por %p318, %p319
      %p322 = scmp.ne.s32.totalorder %s305, %s321
      %p323 = scmp.eq.s32.totalorder %s46, 0
      %p324 = por %p322, %p323
      %p325 = scmp.le.s32.totalorder 1, %s40
      %p326 = scmp.lt.s32.totalorder %s40, 3
      %p327 = pnand %p325, %p326
      %p328 = pneg %p327
      // Predicated region
      $region9: #{tpu_custom_call.1} parent=5 // pred_check
        _
      $region10: #{tpu_custom_call.1} parent=5 // pred_check_branch
        %330 = sbr.rel (%p327) target = $region12
      $region11: #{tpu_custom_call.1} parent=5 // pred_region
        %s331 = ssub.s32 %s40, 1
        // Predicated region
        $region13: #{tpu_custom_call.1} parent=11 // pred_check
          %p332 = pneg %p113
        $region14: #{tpu_custom_call.1} parent=11 // pred_check_branch
          %334 = sbr.rel (%p332) target = $region16
        $region15: #{tpu_custom_call.1} parent=11 // pred_region
          _
        $region16: #{tpu_custom_call.1} parent=11 // pred_fallthru
          _
        // Predicated region
        $region17: #{tpu_custom_call.1} parent=11 // pred_check
          %p335 = pneg %p134
        $region18: #{tpu_custom_call.1} parent=11 // pred_check_branch
          %337 = sbr.rel (%p335) target = $region20
        $region19: #{tpu_custom_call.1} parent=11 // pred_region
          _
        $region20: #{tpu_custom_call.1} parent=11 // pred_fallthru
          _
        // Predicated region
        $region21: #{tpu_custom_call.1} parent=11 // pred_check
          %p338 = pneg %p155
        $region22: #{tpu_custom_call.1} parent=11 // pred_check_branch
          %340 = sbr.rel (%p338) target = $region24
        $region23: #{tpu_custom_call.1} parent=11 // pred_region
          _
        $region24: #{tpu_custom_call.1} parent=11 // pred_fallthru
          _
        // Predicated region
        $region25: #{tpu_custom_call.1} parent=11 // pred_check
          %p341 = pneg %p176
        $region26: #{tpu_custom_call.1} parent=11 // pred_check_branch
          %343 = sbr.rel (%p341) target = $region28
        $region27: #{tpu_custom_call.1} parent=11 // pred_region
          %345 = vsyncadd [#allocation8], 0
          %s346 = sshll.u32 %s6, 4
          %s347 = int_to_ptr.hbm [resolvable:$true] %s346
          %s348 = sshll.u32 [#allocation9], 4
          %s349 = int_to_ptr.vmem [resolvable:$true] %s348
          %354 = dma.hbm_to_vmem [thread:$0]  %s347, 1024, %s349, [#allocation8], 64, 64, 4
        $region28: #{tpu_custom_call.1} parent=11 // pred_fallthru
          _
        // Predicated region
        $region29: #{tpu_custom_call.1} parent=11 // pred_check
          %p355 = pneg %p197
        $region30: #{tpu_custom_call.1} parent=11 // pred_check_branch
          %357 = sbr.rel (%p355) target = $region32
        $region31: #{tpu_custom_call.1} parent=11 // pred_region
          _
        $region32: #{tpu_custom_call.1} parent=11 // pred_fallthru
          _
        // Predicated region
        $region33: #{tpu_custom_call.1} parent=11 // pred_check
          %p358 = pneg %p218
        $region34: #{tpu_custom_call.1} parent=11 // pred_check_branch
          %360 = sbr.rel (%p358) target = $region36
        $region35: #{tpu_custom_call.1} parent=11 // pred_region
          %362 = vsyncadd [#allocation11], 0
          %s363 = sshll.u32 %s8, 4
          %s364 = int_to_ptr.hbm [resolvable:$true] %s363
          %s365 = sshll.u32 [#allocation10], 4
          %s366 = int_to_ptr.vmem [resolvable:$true] %s365
          %371 = dma.hbm_to_vmem [thread:$0]  %s364, 1024, %s366, [#allocation11], 64, 64, 4
        $region36: #{tpu_custom_call.1} parent=11 // pred_fallthru
          _
        // Predicated region
        $region37: #{tpu_custom_call.1} parent=11 // pred_check
          %p372 = pneg %p239
        $region38: #{tpu_custom_call.1} parent=11 // pred_check_branch
          %374 = sbr.rel (%p372) target = $region40
        $region39: #{tpu_custom_call.1} parent=11 // pred_region
          _
        $region40: #{tpu_custom_call.1} parent=11 // pred_fallthru
          _
      $region12: #{tpu_custom_call.1} parent=5 // pred_fallthru
        _
      %p375 = scmp.lt.s32.totalorder %s40, 2
      // Predicated region
      $region41: #{tpu_custom_call.1} parent=5 // pred_check
        %p376 = pneg %p375
      $region42: #{tpu_custom_call.1} parent=5 // pred_check_branch
        %378 = sbr.rel (%p376) target = $region44
      $region43: #{tpu_custom_call.1} parent=5 // pred_region
        // Predicated region
        $region45: #{tpu_custom_call.1} parent=43 // pred_check
          %p379 = pneg %p60
        $region46: #{tpu_custom_call.1} parent=43 // pred_check_branch
          %381 = sbr.rel (%p379) target = $region48
        $region47: #{tpu_custom_call.1} parent=43 // pred_region
          %s382 = sand.u32 %s50, 1
          %s383 = scalar_lea.sflag [#allocation5], %s382
          %s384 = sand.u32 %s50, 1
          %s385 = smul.addr %s384, 128
          %s386 = scalar_lea.vmem [#allocation4], %s385
          %388 = vsyncadd %s383, 0
          %s389 = smul.addr %s40, 16
          %s390 = smul.addr %s389, 8
          %s391 = scalar_lea.hbm %s1, %s390
          %s392 = sshll.u32 %s391, 4
          %s393 = int_to_ptr.hbm [resolvable:$true] %s392
          %s394 = sshll.u32 %s386, 4
          %s395 = int_to_ptr.vmem [resolvable:$true] %s394
          %400 = dma.hbm_to_vmem [thread:$0]  %s393, 2048, %s395, %s383, 128, 128, 8
        $region48: #{tpu_custom_call.1} parent=43 // pred_fallthru
          _
        // Predicated region
        $region49: #{tpu_custom_call.1} parent=43 // pred_check
          %p401 = pneg %p86
        $region50: #{tpu_custom_call.1} parent=43 // pred_check_branch
          %403 = sbr.rel (%p401) target = $region52
        $region51: #{tpu_custom_call.1} parent=43 // pred_region
          %s404 = sand.u32 %s40, 1
          %s405 = scalar_lea.sflag [#allocation8], %s404
          %s406 = sand.u32 %s76, 1
          %s407 = smul.addr %s406, 64
          %s408 = scalar_lea.vmem [#allocation7], %s407
          %410 = vsyncadd %s405, 0
          %s411 = smul.addr %s40, 16
          %s412 = smul.addr %s411, 4
          %s413 = scalar_lea.hbm %s2, %s412
          %s414 = sshll.u32 %s413, 4
          %s415 = int_to_ptr.hbm [resolvable:$true] %s414
          %s416 = sshll.u32 %s408, 4
          %s417 = int_to_ptr.vmem [resolvable:$true] %s416
          %422 = dma.hbm_to_vmem [thread:$0]  %s415, 1024, %s417, %s405, 64, 64, 4
        $region52: #{tpu_custom_call.1} parent=43 // pred_fallthru
          _
      $region44: #{tpu_custom_call.1} parent=5 // pred_fallthru
        _
      %p423 = scmp.le.s32.totalorder 1, %s40
      %p424 = scmp.lt.s32.totalorder %s40, 3
      %p425 = pnand %p423, %p424
      %p426 = pneg %p425
      // Predicated region
      $region53: #{tpu_custom_call.1} parent=5 // pred_check
        _
      $region54: #{tpu_custom_call.1} parent=5 // pred_check_branch
        %428 = sbr.rel (%p425) target = $region56
      $region55: #{tpu_custom_call.1} parent=5 // pred_region
        %s429 = ssub.s32 %s40, 1
        %s430 = sand.u32 %s53, 1
        %s431 = scalar_lea.sflag [#allocation5], %s430
        %s432 = sand.u32 %s53, 1
        %s433 = smul.addr %s432, 128
        %s434 = scalar_lea.vmem [#allocation4], %s433
        // Predicated region
        $region57: #{tpu_custom_call.1} parent=55 // pred_check
          %p435 = pneg %p66
        $region58: #{tpu_custom_call.1} parent=55 // pred_check_branch
          %437 = sbr.rel (%p435) target = $region60
        $region59: #{tpu_custom_call.1} parent=55 // pred_region
          %439 = dma.done %s431, 2048
        $region60: #{tpu_custom_call.1} parent=55 // pred_fallthru
          _
        %s440 = sand.u32 %s45, 1
        %s441 = scalar_lea.sflag [#allocation8], %s440
        %s442 = sand.u32 %s79, 1
        %s443 = smul.addr %s442, 64
        %s444 = scalar_lea.vmem [#allocation7], %s443
        // Predicated region
        $region61: #{tpu_custom_call.1} parent=55 // pred_check
          %p445 = pneg %p92
        $region62: #{tpu_custom_call.1} parent=55 // pred_check_branch
          %447 = sbr.rel (%p445) target = $region64
        $region63: #{tpu_custom_call.1} parent=55 // pred_region
          %449 = dma.done %s441, 1024
        $region64: #{tpu_custom_call.1} parent=55 // pred_fallthru
          _
        // Predicated region
        $region65: #{tpu_custom_call.1} parent=55 // pred_check
          %p450 = pneg %p176
        $region66: #{tpu_custom_call.1} parent=55 // pred_check_branch
          %452 = sbr.rel (%p450) target = $region68
        $region67: #{tpu_custom_call.1} parent=55 // pred_region
          %454 = dma.done [#allocation8], 1024
        $region68: #{tpu_custom_call.1} parent=55 // pred_fallthru
          _
        // Predicated region
        $region69: #{tpu_custom_call.1} parent=55 // pred_check
          %p455 = pneg %p218
        $region70: #{tpu_custom_call.1} parent=55 // pred_check_branch
          %457 = sbr.rel (%p455) target = $region72
        $region71: #{tpu_custom_call.1} parent=55 // pred_region
          %459 = dma.done [#allocation11], 1024
        $region72: #{tpu_custom_call.1} parent=55 // pred_fallthru
          _
        %s460 = sand.u32 %s53, 1
        %s461 = scalar_lea.sflag [#allocation5], %s460
        %s462 = sand.u32 %s53, 1
        %s463 = smul.addr %s462, 128
        %s464 = scalar_lea.vmem [#allocation4], %s463
        %p465 = pneg %p66
        %p466 = pneg %p63
        %s467 = sand.u32 %s45, 1
        %s468 = scalar_lea.sflag [#allocation8], %s467
        %s469 = sand.u32 %s79, 1
        %s470 = smul.addr %s469, 64
        %s471 = scalar_lea.vmem [#allocation7], %s470
        %p472 = pneg %p92
        %p473 = pneg %p89
        %p474 = pneg %p113
        %p475 = pneg %p110
        %p476 = pneg %p134
        %p477 = pneg %p131
        %p478 = pneg %p155
        %p479 = pneg %p152
        %p480 = pneg %p176
        %p481 = pneg %p173
        %p482 = pneg %p197
        %p483 = pneg %p194
        %p484 = pneg %p218
        %p485 = pneg %p215
        %p486 = pneg %p239
        %p487 = pneg %p236
        %p488 = pneg %p265
        %p489 = pneg %p262
        %s490 = sand.u32 %s252, 1
        %s491 = scalar_lea.sflag [#allocation6], %s490
        %s492 = sand.u32 %s252, 1
        %s493 = smul.addr %s492, 8
        %s494 = scalar_lea.vmem [#allocation12], %s493
        %p495 = pneg %p291
        %p496 = pneg %p288
        %s497 = sand.u32 %s45, 1
        %s498 = scalar_lea.sflag [#allocation14], %s497
        %s499 = sand.u32 %s278, 1
        %s500 = smul.addr %s499, 8
        %s501 = scalar_lea.vmem [#allocation13], %s500
        %p502 = pneg %p317
        %p503 = pneg %p314
        %s504 = sand.u32 %s45, 1
        %s505 = scalar_lea.sflag [#allocation14], %s504
        %s506 = sand.u32 %s304, 1
        %s507 = scalar_lea.vmem [#allocation15], %s506
        %s508 = sld [smem:[#allocation3 + %s45]]
        %v509 = vld [vmem:[%s434] sm:$0xff]
        %v510 = vld [vmem:[%s434 + $0x8] sm:$0xff]
        %v511 = vld [vmem:[%s434 + $0x10] sm:$0xff]
        %v512 = vld [vmem:[%s434 + $0x18] sm:$0xff]
        %v513 = vld [vmem:[%s434 + $0x20] sm:$0xff]
        %v514 = vld [vmem:[%s434 + $0x28] sm:$0xff]
        %v515 = vld [vmem:[%s434 + $0x30] sm:$0xff]
        %v516 = vld [vmem:[%s434 + $0x38] sm:$0xff]
        %v517 = vld [vmem:[%s434 + $0x40] sm:$0xff]
        %v518 = vld [vmem:[%s434 + $0x48] sm:$0xff]
        %v519 = vld [vmem:[%s434 + $0x50] sm:$0xff]
        %v520 = vld [vmem:[%s434 + $0x58] sm:$0xff]
        %v521 = vld [vmem:[%s434 + $0x60] sm:$0xff]
        %v522 = vld [vmem:[%s434 + $0x68] sm:$0xff]
        %v523 = vld [vmem:[%s434 + $0x70] sm:$0xff]
        %v524 = vld [vmem:[%s434 + $0x78] sm:$0xff]
        %v525 = vld [vmem:[%s444] sm:$0xf]
        %v526 = vld [vmem:[%s444 + $0x4] sm:$0xf]
        %v527 = vld [vmem:[%s444 + $0x8] sm:$0xf]
        %v528 = vld [vmem:[%s444 + $0xc] sm:$0xf]
        %v529 = vld [vmem:[%s444 + $0x10] sm:$0xf]
        %v530 = vld [vmem:[%s444 + $0x14] sm:$0xf]
        %v531 = vld [vmem:[%s444 + $0x18] sm:$0xf]
        %v532 = vld [vmem:[%s444 + $0x1c] sm:$0xf]
        %v533 = vld [vmem:[%s444 + $0x20] sm:$0xf]
        %v534 = vld [vmem:[%s444 + $0x24] sm:$0xf]
        %v535 = vld [vmem:[%s444 + $0x28] sm:$0xf]
        %v536 = vld [vmem:[%s444 + $0x2c] sm:$0xf]
        %v537 = vld [vmem:[%s444 + $0x30] sm:$0xf]
        %v538 = vld [vmem:[%s444 + $0x34] sm:$0xf]
        %v539 = vld [vmem:[%s444 + $0x38] sm:$0xf]
        %v540 = vld [vmem:[%s444 + $0x3c] sm:$0xf]
        %v541 = vlaneseq
        %v542 = vshrl.u32 %v541, 7
        %v543 = vadd.s32 %v542, 8
        %v544 = vadd.s32 %v542, 16
        %v545 = vadd.s32 %v542, 24
        %v546 = vadd.s32 %v542, 32
        %v547 = vadd.s32 %v542, 40
        %v548 = vadd.s32 %v542, 48
        %v549 = vadd.s32 %v542, 56
        %v550 = vadd.s32 %v542, 64
        %v551 = vadd.s32 %v542, 72
        %v552 = vadd.s32 %v542, 80
        %v553 = vadd.s32 %v542, 88
        %v554 = vadd.s32 %v542, 96
        %v555 = vadd.s32 %v542, 104
        %v556 = vadd.s32 %v542, 112
        %v557 = vadd.s32 %v542, 120
        %v558 = vstv %s508
        %vm559 = vcmp.lt.s32.totalorder %v542, %v558
        %vm560 = vcmp.lt.s32.totalorder %v543, %v558
        %vm561 = vcmp.lt.s32.totalorder %v544, %v558
        %vm562 = vcmp.lt.s32.totalorder %v545, %v558
        %vm563 = vcmp.lt.s32.totalorder %v546, %v558
        %vm564 = vcmp.lt.s32.totalorder %v547, %v558
        %vm565 = vcmp.lt.s32.totalorder %v548, %v558
        %vm566 = vcmp.lt.s32.totalorder %v549, %v558
        %vm567 = vcmp.lt.s32.totalorder %v550, %v558
        %vm568 = vcmp.lt.s32.totalorder %v551, %v558
        %vm569 = vcmp.lt.s32.totalorder %v552, %v558
        %vm570 = vcmp.lt.s32.totalorder %v553, %v558
        %vm571 = vcmp.lt.s32.totalorder %v554, %v558
        %vm572 = vcmp.lt.s32.totalorder %v555, %v558
        %vm573 = vcmp.lt.s32.totalorder %v556, %v558
        %vm574 = vcmp.lt.s32.totalorder %v557, %v558
        %v575 = vsel %vm559, 1, 0
        %v576 = vsel %vm560, 1, 0
        %v577 = vsel %vm561, 1, 0
        %v578 = vsel %vm562, 1, 0
        %v579 = vsel %vm563, 1, 0
        %v580 = vsel %vm564, 1, 0
        %v581 = vsel %vm565, 1, 0
        %v582 = vsel %vm566, 1, 0
        %v583 = vsel %vm567, 1, 0
        %v584 = vsel %vm568, 1, 0
        %v585 = vsel %vm569, 1, 0
        %v586 = vsel %vm570, 1, 0
        %v587 = vsel %vm571, 1, 0
        %v588 = vsel %vm572, 1, 0
        %v589 = vsel %vm573, 1, 0
        %v590 = vsel %vm574, 1, 0
        %v591 = vcvt.s32.f32 %v575
        %v592 = vcvt.s32.f32 %v576
        %v593 = vcvt.s32.f32 %v577
        %v594 = vcvt.s32.f32 %v578
        %v595 = vcvt.s32.f32 %v579
        %v596 = vcvt.s32.f32 %v580
        %v597 = vcvt.s32.f32 %v581
        %v598 = vcvt.s32.f32 %v582
        %v599 = vcvt.s32.f32 %v583
        %v600 = vcvt.s32.f32 %v584
        %v601 = vcvt.s32.f32 %v585
        %v602 = vcvt.s32.f32 %v586
        %v603 = vcvt.s32.f32 %v587
        %v604 = vcvt.s32.f32 %v588
        %v605 = vcvt.s32.f32 %v589
        %v606 = vcvt.s32.f32 %v590
        %s607 = scvt.s32.f32 %s508
        %s608 = smax.f32 %s607, 1.0
        %v609 = vstv %s608
        %v610 = vrcp.pop %v609
        %v611 = vmul.f32 %v609, %v610
        %v612 = vsub.f32 1.0, %v611
        %v613 = vmul.f32 %v610, %v612
        %v614 = vadd.f32 %v610, %v613
        %vm615 = vweird.f32 %v609
        %vm616 = vweird.f32 %v610
        %vm617 = vmor %vm615, %vm616
        %v618 = vsel %vm617, %v610, %v614
        %v619 = vand.u32 2147483647, %v609
        %vm620 = vcmp.eq.f32.partialorder %v619, 8.507059e+37
        %v621 = vand.u32 %v609, 2147483648
        %v622 = vor.u32 1.1754944e-38, %v621
        %v623 = vsel %vm620, %v622, %v618
        %s624 = vtos %v623
        %v625 = vadd.f32 %v509, %v510
        %v626 = vadd.f32 %v625, %v511
        %v627 = vadd.f32 %v626, %v512
        %v628 = vadd.f32 %v627, %v513
        %v629 = vadd.f32 %v628, %v514
        %v630 = vadd.f32 %v629, %v515
        %v631 = vadd.f32 %v630, %v516
        %v632 = vadd.f32 %v631, %v517
        %v633 = vadd.f32 %v632, %v518
        %v634 = vadd.f32 %v633, %v519
        %v635 = vadd.f32 %v634, %v520
        %v636 = vadd.f32 %v635, %v521
        %v637 = vadd.f32 %v636, %v522
        %v638 = vadd.f32 %v637, %v523
        %v639 = vadd.f32 %v638, %v524
        %v640 = vrot.slane %v639, 4
        %v641 = vadd.f32 %v639, %v640
        %v642 = vrot.slane %v641, 2
        %v643 = vadd.f32 %v641, %v642
        %v644 = vrot.slane %v643, 1
        %v645 = vadd.f32 %v643, %v644
        %v646 = vstv %s624
        %v647 = vmul.f32 %v645, %v646
        %v648 = vld [vmem:[%s5] sm:$0x1]
        %v649 = vmul.f32 %v647, %v648
        %v650 = vperm.slane %v649, 0
        %v651 = vsub.f32 %v509, %v650
        %v652 = vsub.f32 %v510, %v650
        %v653 = vsub.f32 %v511, %v650
        %v654 = vsub.f32 %v512, %v650
        %v655 = vsub.f32 %v513, %v650
        %v656 = vsub.f32 %v514, %v650
        %v657 = vsub.f32 %v515, %v650
        %v658 = vsub.f32 %v516, %v650
        %v659 = vsub.f32 %v517, %v650
        %v660 = vsub.f32 %v518, %v650
        %v661 = vsub.f32 %v519, %v650
        %v662 = vsub.f32 %v520, %v650
        %v663 = vsub.f32 %v521, %v650
        %v664 = vsub.f32 %v522, %v650
        %v665 = vsub.f32 %v523, %v650
        %v666 = vsub.f32 %v524, %v650
        %v667 = vmul.f32 %v651, %v591
        %v668 = vmul.f32 %v652, %v592
        %v669 = vmul.f32 %v653, %v593
        %v670 = vmul.f32 %v654, %v594
        %v671 = vmul.f32 %v655, %v595
        %v672 = vmul.f32 %v656, %v596
        %v673 = vmul.f32 %v657, %v597
        %v674 = vmul.f32 %v658, %v598
        %v675 = vmul.f32 %v659, %v599
        %v676 = vmul.f32 %v660, %v600
        %v677 = vmul.f32 %v661, %v601
        %v678 = vmul.f32 %v662, %v602
        %v679 = vmul.f32 %v663, %v603
        %v680 = vmul.f32 %v664, %v604
        %v681 = vmul.f32 %v665, %v605
        %v682 = vmul.f32 %v666, %v606
        %v683 = vmul.f32 %v667, %v667
        %v684 = vmul.f32 %v668, %v668
        %v685 = vmul.f32 %v669, %v669
        %v686 = vmul.f32 %v670, %v670
        %v687 = vmul.f32 %v671, %v671
        %v688 = vmul.f32 %v672, %v672
        %v689 = vmul.f32 %v673, %v673
        %v690 = vmul.f32 %v674, %v674
        %v691 = vmul.f32 %v675, %v675
        %v692 = vmul.f32 %v676, %v676
        %v693 = vmul.f32 %v677, %v677
        %v694 = vmul.f32 %v678, %v678
        %v695 = vmul.f32 %v679, %v679
        %v696 = vmul.f32 %v680, %v680
        %v697 = vmul.f32 %v681, %v681
        %v698 = vmul.f32 %v682, %v682
        %v699 = vadd.f32 %v683, %v684
        %v700 = vadd.f32 %v699, %v685
        %v701 = vadd.f32 %v700, %v686
        %v702 = vadd.f32 %v701, %v687
        %v703 = vadd.f32 %v702, %v688
        %v704 = vadd.f32 %v703, %v689
        %v705 = vadd.f32 %v704, %v690
        %v706 = vadd.f32 %v705, %v691
        %v707 = vadd.f32 %v706, %v692
        %v708 = vadd.f32 %v707, %v693
        %v709 = vadd.f32 %v708, %v694
        %v710 = vadd.f32 %v709, %v695
        %v711 = vadd.f32 %v710, %v696
        %v712 = vadd.f32 %v711, %v697
        %v713 = vadd.f32 %v712, %v698
        %v714 = vrot.slane %v713, 4
        %v715 = vadd.f32 %v713, %v714
        %v716 = vrot.slane %v715, 2
        %v717 = vadd.f32 %v715, %v716
        %v718 = vrot.slane %v717, 1
        %v719 = vadd.f32 %v717, %v718
        %v720 = vmul.f32 %v719, %v646
        %v721 = vld [vmem:[%s3] sm:$0x1]
        %v723 = vperm.slane %v721, 0
        %v725 = vmul.f32 %v723, %v667
        %v726 = vmul.f32 %v723, %v668
        %v727 = vmul.f32 %v723, %v669
        %v728 = vmul.f32 %v723, %v670
        %v729 = vmul.f32 %v723, %v671
        %v730 = vmul.f32 %v723, %v672
        %v731 = vmul.f32 %v723, %v673
        %v732 = vmul.f32 %v723, %v674
        %v733 = vmul.f32 %v723, %v675
        %v734 = vmul.f32 %v723, %v676
        %v735 = vmul.f32 %v723, %v677
        %v736 = vmul.f32 %v723, %v678
        %v737 = vmul.f32 %v723, %v679
        %v738 = vmul.f32 %v723, %v680
        %v739 = vmul.f32 %v723, %v681
        %v740 = vmul.f32 %v723, %v682
        %v741 = vadd.f32 %v720, 1e-05
        %v742 = vrsqrt.pop %v741
        %v743 = vmul.f32 %v742, %v741
        %v744 = vmul.f32 %v743, %v742
        %v745 = vmul.f32 0.5, %v744
        %v746 = vsub.f32 1.5, %v745
        %v747 = vmul.f32 %v742, %v746
        %vm748 = vweird.f32 %v741
        %vm749 = vweird.f32 %v742
        %vm750 = vmor %vm748, %vm749
        %v751 = vsel %vm750, %v742, %v747
        %v752 = vmul.f32 %v725, %v751
        %v753 = vmul.f32 %v726, %v751
        %v754 = vmul.f32 %v727, %v751
        %v755 = vmul.f32 %v728, %v751
        %v756 = vmul.f32 %v729, %v751
        %v757 = vmul.f32 %v730, %v751
        %v758 = vmul.f32 %v731, %v751
        %v759 = vmul.f32 %v732, %v751
        %v760 = vmul.f32 %v733, %v751
        %v761 = vmul.f32 %v734, %v751
        %v762 = vmul.f32 %v735, %v751
        %v763 = vmul.f32 %v736, %v751
        %v764 = vmul.f32 %v737, %v751
        %v765 = vmul.f32 %v738, %v751
        %v766 = vmul.f32 %v739, %v751
        %v767 = vmul.f32 %v740, %v751
        %v768 = vld [vmem:[%s4] sm:$0x1]
        %v770 = vperm.slane %v768, 0
        %v772 = vadd.f32 %v752, %v770
        %v773 = vadd.f32 %v753, %v770
        %v774 = vadd.f32 %v754, %v770
        %v775 = vadd.f32 %v755, %v770
        %v776 = vadd.f32 %v756, %v770
        %v777 = vadd.f32 %v757, %v770
        %v778 = vadd.f32 %v758, %v770
        %v779 = vadd.f32 %v759, %v770
        %v780 = vadd.f32 %v760, %v770
        %v781 = vadd.f32 %v761, %v770
        %v782 = vadd.f32 %v762, %v770
        %v783 = vadd.f32 %v763, %v770
        %v784 = vadd.f32 %v764, %v770
        %v785 = vadd.f32 %v765, %v770
        %v786 = vadd.f32 %v766, %v770
        %v787 = vadd.f32 %v767, %v770
        %v788 = vunpack.c.l.bf16 %v525
        %v789 = vunpack.c.l.bf16 %v526
        %v790 = vunpack.c.l.bf16 %v527
        %v791 = vunpack.c.l.bf16 %v528
        %v792 = vunpack.c.l.bf16 %v529
        %v793 = vunpack.c.l.bf16 %v530
        %v794 = vunpack.c.l.bf16 %v531
        %v795 = vunpack.c.l.bf16 %v532
        %v796 = vunpack.c.l.bf16 %v533
        %v797 = vunpack.c.l.bf16 %v534
        %v798 = vunpack.c.l.bf16 %v535
        %v799 = vunpack.c.l.bf16 %v536
        %v800 = vunpack.c.l.bf16 %v537
        %v801 = vunpack.c.l.bf16 %v538
        %v802 = vunpack.c.l.bf16 %v539
        %v803 = vunpack.c.l.bf16 %v540
        %804 = vadd.xlane.f32.xlu0 %v788
        %v805 = vpop.xlane.xlu0 %804
        %806 = vadd.xlane.f32.xlu0 %v789
        %v807 = vpop.xlane.xlu0 %806
        %808 = vadd.xlane.f32.xlu0 %v790
        %v809 = vpop.xlane.xlu0 %808
        %810 = vadd.xlane.f32.xlu0 %v791
        %v811 = vpop.xlane.xlu0 %810
        %812 = vadd.xlane.f32.xlu0 %v792
        %v813 = vpop.xlane.xlu0 %812
        %814 = vadd.xlane.f32.xlu0 %v793
        %v815 = vpop.xlane.xlu0 %814
        %816 = vadd.xlane.f32.xlu0 %v794
        %v817 = vpop.xlane.xlu0 %816
        %818 = vadd.xlane.f32.xlu0 %v795
        %v819 = vpop.xlane.xlu0 %818
        %820 = vadd.xlane.f32.xlu0 %v796
        %v821 = vpop.xlane.xlu0 %820
        %822 = vadd.xlane.f32.xlu0 %v797
        %v823 = vpop.xlane.xlu0 %822
        %824 = vadd.xlane.f32.xlu0 %v798
        %v825 = vpop.xlane.xlu0 %824
        %826 = vadd.xlane.f32.xlu0 %v799
        %v827 = vpop.xlane.xlu0 %826
        %828 = vadd.xlane.f32.xlu0 %v800
        %v829 = vpop.xlane.xlu0 %828
        %830 = vadd.xlane.f32.xlu0 %v801
        %v831 = vpop.xlane.xlu0 %830
        %832 = vadd.xlane.f32.xlu0 %v802
        %v833 = vpop.xlane.xlu0 %832
        %834 = vadd.xlane.f32.xlu0 %v803
        %v835 = vpop.xlane.xlu0 %834
        %v836 = vadd.f32 %v805, %v591
        %v837 = vadd.f32 %v807, %v592
        %v838 = vadd.f32 %v809, %v593
        %v839 = vadd.f32 %v811, %v594
        %v840 = vadd.f32 %v813, %v595
        %v841 = vadd.f32 %v815, %v596
        %v842 = vadd.f32 %v817, %v597
        %v843 = vadd.f32 %v819, %v598
        %v844 = vadd.f32 %v821, %v599
        %v845 = vadd.f32 %v823, %v600
        %v846 = vadd.f32 %v825, %v601
        %v847 = vadd.f32 %v827, %v602
        %v848 = vadd.f32 %v829, %v603
        %v849 = vadd.f32 %v831, %v604
        %v850 = vadd.f32 %v833, %v605
        %v851 = vadd.f32 %v835, %v606
        %vm852 = vcmp.gt.f32.partialorder %v836, 0.0
        %vm853 = vcmp.gt.f32.partialorder %v837, 0.0
        %vm854 = vcmp.gt.f32.partialorder %v838, 0.0
        %vm855 = vcmp.gt.f32.partialorder %v839, 0.0
        %vm856 = vcmp.gt.f32.partialorder %v840, 0.0
        %vm857 = vcmp.gt.f32.partialorder %v841, 0.0
        %vm858 = vcmp.gt.f32.partialorder %v842, 0.0
        %vm859 = vcmp.gt.f32.partialorder %v843, 0.0
        %vm860 = vcmp.gt.f32.partialorder %v844, 0.0
        %vm861 = vcmp.gt.f32.partialorder %v845, 0.0
        %vm862 = vcmp.gt.f32.partialorder %v846, 0.0
        %vm863 = vcmp.gt.f32.partialorder %v847, 0.0
        %vm864 = vcmp.gt.f32.partialorder %v848, 0.0
        %vm865 = vcmp.gt.f32.partialorder %v849, 0.0
        %vm866 = vcmp.gt.f32.partialorder %v850, 0.0
        %vm867 = vcmp.gt.f32.partialorder %v851, 0.0
        %v868 = vrsqrt.pop %v836
        %v869 = vmul.f32 %v868, %v836
        %v870 = vmul.f32 %v869, %v868
        %v871 = vmul.f32 0.5, %v870
        %v872 = vsub.f32 1.5, %v871
        %v873 = vmul.f32 %v868, %v872
        %vm874 = vweird.f32 %v836
        %vm875 = vweird.f32 %v868
        %vm876 = vmor %vm874, %vm875
        %v877 = vsel %vm876, %v868, %v873
        %v878 = vrsqrt.pop %v837
        %v879 = vmul.f32 %v878, %v837
        %v880 = vmul.f32 %v879, %v878
        %v881 = vmul.f32 0.5, %v880
        %v882 = vsub.f32 1.5, %v881
        %v883 = vmul.f32 %v878, %v882
        %vm884 = vweird.f32 %v837
        %vm885 = vweird.f32 %v878
        %vm886 = vmor %vm884, %vm885
        %v887 = vsel %vm886, %v878, %v883
        %v888 = vrsqrt.pop %v838
        %v889 = vmul.f32 %v888, %v838
        %v890 = vmul.f32 %v889, %v888
        %v891 = vmul.f32 0.5, %v890
        %v892 = vsub.f32 1.5, %v891
        %v893 = vmul.f32 %v888, %v892
        %vm894 = vweird.f32 %v838
        %vm895 = vweird.f32 %v888
        %vm896 = vmor %vm894, %vm895
        %v897 = vsel %vm896, %v888, %v893
        %v898 = vrsqrt.pop %v839
        %v899 = vmul.f32 %v898, %v839
        %v900 = vmul.f32 %v899, %v898
        %v901 = vmul.f32 0.5, %v900
        %v902 = vsub.f32 1.5, %v901
        %v903 = vmul.f32 %v898, %v902
        %vm904 = vweird.f32 %v839
        %vm905 = vweird.f32 %v898
        %vm906 = vmor %vm904, %vm905
        %v907 = vsel %vm906, %v898, %v903
        %v908 = vrsqrt.pop %v840
        %v909 = vmul.f32 %v908, %v840
        %v910 = vmul.f32 %v909, %v908
        %v911 = vmul.f32 0.5, %v910
        %v912 = vsub.f32 1.5, %v911
        %v913 = vmul.f32 %v908, %v912
        %vm914 = vweird.f32 %v840
        %vm915 = vweird.f32 %v908
        %vm916 = vmor %vm914, %vm915
        %v917 = vsel %vm916, %v908, %v913
        %v918 = vrsqrt.pop %v841
        %v919 = vmul.f32 %v918, %v841
        %v920 = vmul.f32 %v919, %v918
        %v921 = vmul.f32 0.5, %v920
        %v922 = vsub.f32 1.5, %v921
        %v923 = vmul.f32 %v918, %v922
        %vm924 = vweird.f32 %v841
        %vm925 = vweird.f32 %v918
        %vm926 = vmor %vm924, %vm925
        %v927 = vsel %vm926, %v918, %v923
        %v928 = vrsqrt.pop %v842
        %v929 = vmul.f32 %v928, %v842
        %v930 = vmul.f32 %v929, %v928
        %v931 = vmul.f32 0.5, %v930
        %v932 = vsub.f32 1.5, %v931
        %v933 = vmul.f32 %v928, %v932
        %vm934 = vweird.f32 %v842
        %vm935 = vweird.f32 %v928
        %vm936 = vmor %vm934, %vm935
        %v937 = vsel %vm936, %v928, %v933
        %v938 = vrsqrt.pop %v843
        %v939 = vmul.f32 %v938, %v843
        %v940 = vmul.f32 %v939, %v938
        %v941 = vmul.f32 0.5, %v940
        %v942 = vsub.f32 1.5, %v941
        %v943 = vmul.f32 %v938, %v942
        %vm944 = vweird.f32 %v843
        %vm945 = vweird.f32 %v938
        %vm946 = vmor %vm944, %vm945
        %v947 = vsel %vm946, %v938, %v943
        %v948 = vrsqrt.pop %v844
        %v949 = vmul.f32 %v948, %v844
        %v950 = vmul.f32 %v949, %v948
        %v951 = vmul.f32 0.5, %v950
        %v952 = vsub.f32 1.5, %v951
        %v953 = vmul.f32 %v948, %v952
        %vm954 = vweird.f32 %v844
        %vm955 = vweird.f32 %v948
        %vm956 = vmor %vm954, %vm955
        %v957 = vsel %vm956, %v948, %v953
        %v958 = vrsqrt.pop %v845
        %v959 = vmul.f32 %v958, %v845
        %v960 = vmul.f32 %v959, %v958
        %v961 = vmul.f32 0.5, %v960
        %v962 = vsub.f32 1.5, %v961
        %v963 = vmul.f32 %v958, %v962
        %vm964 = vweird.f32 %v845
        %vm965 = vweird.f32 %v958
        %vm966 = vmor %vm964, %vm965
        %v967 = vsel %vm966, %v958, %v963
        %v968 = vrsqrt.pop %v846
        %v969 = vmul.f32 %v968, %v846
        %v970 = vmul.f32 %v969, %v968
        %v971 = vmul.f32 0.5, %v970
        %v972 = vsub.f32 1.5, %v971
        %v973 = vmul.f32 %v968, %v972
        %vm974 = vweird.f32 %v846
        %vm975 = vweird.f32 %v968
        %vm976 = vmor %vm974, %vm975
        %v977 = vsel %vm976, %v968, %v973
        %v978 = vrsqrt.pop %v847
        %v979 = vmul.f32 %v978, %v847
        %v980 = vmul.f32 %v979, %v978
        %v981 = vmul.f32 0.5, %v980
        %v982 = vsub.f32 1.5, %v981
        %v983 = vmul.f32 %v978, %v982
        %vm984 = vweird.f32 %v847
        %vm985 = vweird.f32 %v978
        %vm986 = vmor %vm984, %vm985
        %v987 = vsel %vm986, %v978, %v983
        %v988 = vrsqrt.pop %v848
        %v989 = vmul.f32 %v988, %v848
        %v990 = vmul.f32 %v989, %v988
        %v991 = vmul.f32 0.5, %v990
        %v992 = vsub.f32 1.5, %v991
        %v993 = vmul.f32 %v988, %v992
        %vm994 = vweird.f32 %v848
        %vm995 = vweird.f32 %v988
        %vm996 = vmor %vm994, %vm995
        %v997 = vsel %vm996, %v988, %v993
        %v998 = vrsqrt.pop %v849
        %v999 = vmul.f32 %v998, %v849
        %v1000 = vmul.f32 %v999, %v998
        %v1001 = vmul.f32 0.5, %v1000
        %v1002 = vsub.f32 1.5, %v1001
        %v1003 = vmul.f32 %v998, %v1002
        %vm1004 = vweird.f32 %v849
        %vm1005 = vweird.f32 %v998
        %vm1006 = vmor %vm1004, %vm1005
        %v1007 = vsel %vm1006, %v998, %v1003
        %v1008 = vrsqrt.pop %v850
        %v1009 = vmul.f32 %v1008, %v850
        %v1010 = vmul.f32 %v1009, %v1008
        %v1011 = vmul.f32 0.5, %v1010
        %v1012 = vsub.f32 1.5, %v1011
        %v1013 = vmul.f32 %v1008, %v1012
        %vm1014 = vweird.f32 %v850
        %vm1015 = vweird.f32 %v1008
        %vm1016 = vmor %vm1014, %vm1015
        %v1017 = vsel %vm1016, %v1008, %v1013
        %v1018 = vrsqrt.pop %v851
        %v1019 = vmul.f32 %v1018, %v851
        %v1020 = vmul.f32 %v1019, %v1018
        %v1021 = vmul.f32 0.5, %v1020
        %v1022 = vsub.f32 1.5, %v1021
        %v1023 = vmul.f32 %v1018, %v1022
        %vm1024 = vweird.f32 %v851
        %vm1025 = vweird.f32 %v1018
        %vm1026 = vmor %vm1024, %vm1025
        %v1027 = vsel %vm1026, %v1018, %v1023
        %v1028 = vsel %vm852, %v877, 0.0
        %v1029 = vsel %vm853, %v887, 0.0
        %v1030 = vsel %vm854, %v897, 0.0
        %v1031 = vsel %vm855, %v907, 0.0
        %v1032 = vsel %vm856, %v917, 0.0
        %v1033 = vsel %vm857, %v927, 0.0
        %v1034 = vsel %vm858, %v937, 0.0
        %v1035 = vsel %vm859, %v947, 0.0
        %v1036 = vsel %vm860, %v957, 0.0
        %v1037 = vsel %vm861, %v967, 0.0
        %v1038 = vsel %vm862, %v977, 0.0
        %v1039 = vsel %vm863, %v987, 0.0
        %v1040 = vsel %vm864, %v997, 0.0
        %v1041 = vsel %vm865, %v1007, 0.0
        %v1042 = vsel %vm866, %v1017, 0.0
        %v1043 = vsel %vm867, %v1027, 0.0
        %v1044 = vpack.c.bf16 %v773, %v772
        %v1045 = vpack.c.bf16 %v775, %v774
        %v1046 = vpack.c.bf16 %v777, %v776
        %v1047 = vpack.c.bf16 %v779, %v778
        %v1048 = vpack.c.bf16 %v781, %v780
        %v1049 = vpack.c.bf16 %v783, %v782
        %v1050 = vpack.c.bf16 %v785, %v784
        %v1051 = vpack.c.bf16 %v787, %v786
        %v1052 = vld [vmem:[#allocation9] sm:$0xf]
        %v1053 = vld [vmem:[#allocation9 + $0x4] sm:$0xf]
        %v1054 = vld [vmem:[#allocation9 + $0x8] sm:$0xf]
        %v1055 = vld [vmem:[#allocation9 + $0xc] sm:$0xf]
        %v1056 = vld [vmem:[#allocation9 + $0x10] sm:$0xf]
        %v1057 = vld [vmem:[#allocation9 + $0x14] sm:$0xf]
        %v1058 = vld [vmem:[#allocation9 + $0x18] sm:$0xf]
        %v1059 = vld [vmem:[#allocation9 + $0x1c] sm:$0xf]
        %v1060 = vld [vmem:[#allocation9 + $0x20] sm:$0xf]
        %v1061 = vld [vmem:[#allocation9 + $0x24] sm:$0xf]
        %v1062 = vld [vmem:[#allocation9 + $0x28] sm:$0xf]
        %v1063 = vld [vmem:[#allocation9 + $0x2c] sm:$0xf]
        %v1064 = vld [vmem:[#allocation9 + $0x30] sm:$0xf]
        %v1065 = vld [vmem:[#allocation9 + $0x34] sm:$0xf]
        %v1066 = vld [vmem:[#allocation9 + $0x38] sm:$0xf]
        %v1067 = vld [vmem:[#allocation9 + $0x3c] sm:$0xf]
        %v1084 = vunpack.c.l.b16 %v1052
        %v1085 = vunpack.c.l.b16 %v1053
        %v1086 = vunpack.c.l.b16 %v1054
        %v1087 = vunpack.c.l.b16 %v1055
        %v1088 = vunpack.c.l.b16 %v1056
        %v1089 = vunpack.c.l.b16 %v1057
        %v1090 = vunpack.c.l.b16 %v1058
        %v1091 = vunpack.c.l.b16 %v1059
        %v1092 = vunpack.c.l.b16 %v1060
        %v1093 = vunpack.c.l.b16 %v1061
        %v1094 = vunpack.c.l.b16 %v1062
        %v1095 = vunpack.c.l.b16 %v1063
        %v1096 = vunpack.c.l.b16 %v1064
        %v1097 = vunpack.c.l.b16 %v1065
        %v1098 = vunpack.c.l.b16 %v1066
        %v1099 = vunpack.c.l.b16 %v1067
        %v1100 = vpack.c.b16 %v1085, %v1084
        %v1101 = vpack.c.b16 %v1087, %v1086
        %v1102 = vpack.c.b16 %v1089, %v1088
        %v1103 = vpack.c.b16 %v1091, %v1090
        %v1104 = vpack.c.b16 %v1093, %v1092
        %v1105 = vpack.c.b16 %v1095, %v1094
        %v1106 = vpack.c.b16 %v1097, %v1096
        %v1107 = vpack.c.b16 %v1099, %v1098
        %1116 = vmatpush.bf16.msra.mxu0 %v1107
        %1117 = vmatpush.bf16.msra.mxu0 %v1106
        %1118 = vmatpush.bf16.msra.mxu0 %v1105
        %1119 = vmatpush.bf16.msra.mxu0 %v1104
        %1120 = vmatpush.bf16.msra.mxu0 %v1103
        %1121 = vmatpush.bf16.msra.mxu0 %v1102
        %1122 = vmatpush.bf16.msra.mxu0 %v1101
        %1123 = vmatpush.bf16.msra.mxu0 %v1100
        %1124 = vmatmul.bf16.gmra.mxu0 %v1044
        %v1125 = vpop.f32.mrf.mxu0
        %v1126 = vadd.f32 0.0, %v1125
        %v1127 = vpop.f32.mrf.mxu0
        %v1128 = vadd.f32 0.0, %v1127
        %1129 = vmatmul.bf16.gmra.mxu0 %v1045
        %v1130 = vpop.f32.mrf.mxu0
        %v1131 = vadd.f32 0.0, %v1130
        %v1132 = vpop.f32.mrf.mxu0
        %v1133 = vadd.f32 0.0, %v1132
        %1134 = vmatmul.bf16.gmra.mxu0 %v1046
        %v1135 = vpop.f32.mrf.mxu0
        %v1136 = vadd.f32 0.0, %v1135
        %v1137 = vpop.f32.mrf.mxu0
        %v1138 = vadd.f32 0.0, %v1137
        %1139 = vmatmul.bf16.gmra.mxu0 %v1047
        %v1140 = vpop.f32.mrf.mxu0
        %v1141 = vadd.f32 0.0, %v1140
        %v1142 = vpop.f32.mrf.mxu0
        %v1143 = vadd.f32 0.0, %v1142
        %1144 = vmatmul.bf16.gmra.mxu0 %v1048
        %v1145 = vpop.f32.mrf.mxu0
        %v1146 = vadd.f32 0.0, %v1145
        %v1147 = vpop.f32.mrf.mxu0
        %v1148 = vadd.f32 0.0, %v1147
        %1149 = vmatmul.bf16.gmra.mxu0 %v1049
        %v1150 = vpop.f32.mrf.mxu0
        %v1151 = vadd.f32 0.0, %v1150
        %v1152 = vpop.f32.mrf.mxu0
        %v1153 = vadd.f32 0.0, %v1152
        %1154 = vmatmul.bf16.gmra.mxu0 %v1050
        %v1155 = vpop.f32.mrf.mxu0
        %v1156 = vadd.f32 0.0, %v1155
        %v1157 = vpop.f32.mrf.mxu0
        %v1158 = vadd.f32 0.0, %v1157
        %1159 = vmatmul.bf16.gmra.mxu0 %v1051
        %v1160 = vpop.f32.mrf.mxu0
        %v1161 = vadd.f32 0.0, %v1160
        %v1162 = vpop.f32.mrf.mxu0
        %v1163 = vadd.f32 0.0, %v1162
        %1164 = vdwg.mxu0
        %v1165 = vmul.f32 %v1028, %v1126
        %v1166 = vmul.f32 %v1029, %v1128
        %v1167 = vmul.f32 %v1030, %v1131
        %v1168 = vmul.f32 %v1031, %v1133
        %v1169 = vmul.f32 %v1032, %v1136
        %v1170 = vmul.f32 %v1033, %v1138
        %v1171 = vmul.f32 %v1034, %v1141
        %v1172 = vmul.f32 %v1035, %v1143
        %v1173 = vmul.f32 %v1036, %v1146
        %v1174 = vmul.f32 %v1037, %v1148
        %v1175 = vmul.f32 %v1038, %v1151
        %v1176 = vmul.f32 %v1039, %v1153
        %v1177 = vmul.f32 %v1040, %v1156
        %v1178 = vmul.f32 %v1041, %v1158
        %v1179 = vmul.f32 %v1042, %v1161
        %v1180 = vmul.f32 %v1043, %v1163
        %v1181 = vpack.c.bf16 %v1166, %v1165
        %v1182 = vpack.c.bf16 %v1168, %v1167
        %v1183 = vpack.c.bf16 %v1170, %v1169
        %v1184 = vpack.c.bf16 %v1172, %v1171
        %v1185 = vpack.c.bf16 %v1174, %v1173
        %v1186 = vpack.c.bf16 %v1176, %v1175
        %v1187 = vpack.c.bf16 %v1178, %v1177
        %v1188 = vpack.c.bf16 %v1180, %v1179
        %v1205 = vunpack.c.l.b16 %v525
        %v1206 = vunpack.c.l.b16 %v526
        %v1207 = vunpack.c.l.b16 %v527
        %v1208 = vunpack.c.l.b16 %v528
        %v1209 = vunpack.c.l.b16 %v529
        %v1210 = vunpack.c.l.b16 %v530
        %v1211 = vunpack.c.l.b16 %v531
        %v1212 = vunpack.c.l.b16 %v532
        %v1213 = vunpack.c.l.b16 %v533
        %v1214 = vunpack.c.l.b16 %v534
        %v1215 = vunpack.c.l.b16 %v535
        %v1216 = vunpack.c.l.b16 %v536
        %v1217 = vunpack.c.l.b16 %v537
        %v1218 = vunpack.c.l.b16 %v538
        %v1219 = vunpack.c.l.b16 %v539
        %v1220 = vunpack.c.l.b16 %v540
        %v1221 = vpack.c.b16 %v1206, %v1205
        %v1222 = vpack.c.b16 %v1208, %v1207
        %v1223 = vpack.c.b16 %v1210, %v1209
        %v1224 = vpack.c.b16 %v1212, %v1211
        %v1225 = vpack.c.b16 %v1214, %v1213
        %v1226 = vpack.c.b16 %v1216, %v1215
        %v1227 = vpack.c.b16 %v1218, %v1217
        %v1228 = vpack.c.b16 %v1220, %v1219
        %1237 = vmatpush.bf16.msra.mxu0 %v1188
        %1238 = vmatpush.bf16.msra.mxu0 %v1187
        %1239 = vmatpush.bf16.msra.mxu0 %v1186
        %1240 = vmatpush.bf16.msra.mxu0 %v1185
        %1241 = vmatpush.bf16.msra.mxu0 %v1184
        %1242 = vmatpush.bf16.msra.mxu0 %v1183
        %1243 = vmatpush.bf16.msra.mxu0 %v1182
        %1244 = vmatpush.bf16.msra.mxu0 %v1181
        %1245 = vmatmul.bf16.gmra.mxu0 %v1221
        %v1246 = vpop.f32.mrf.mxu0
        %v1247 = vadd.f32 %v1165, %v1246
        %v1248 = vpop.f32.mrf.mxu0
        %v1249 = vadd.f32 %v1166, %v1248
        %1250 = vmatmul.bf16.gmra.mxu0 %v1222
        %v1251 = vpop.f32.mrf.mxu0
        %v1252 = vadd.f32 %v1167, %v1251
        %v1253 = vpop.f32.mrf.mxu0
        %v1254 = vadd.f32 %v1168, %v1253
        %1255 = vmatmul.bf16.gmra.mxu0 %v1223
        %v1256 = vpop.f32.mrf.mxu0
        %v1257 = vadd.f32 %v1169, %v1256
        %v1258 = vpop.f32.mrf.mxu0
        %v1259 = vadd.f32 %v1170, %v1258
        %1260 = vmatmul.bf16.gmra.mxu0 %v1224
        %v1261 = vpop.f32.mrf.mxu0
        %v1262 = vadd.f32 %v1171, %v1261
        %v1263 = vpop.f32.mrf.mxu0
        %v1264 = vadd.f32 %v1172, %v1263
        %1265 = vmatmul.bf16.gmra.mxu0 %v1225
        %v1266 = vpop.f32.mrf.mxu0
        %v1267 = vadd.f32 %v1173, %v1266
        %v1268 = vpop.f32.mrf.mxu0
        %v1269 = vadd.f32 %v1174, %v1268
        %1270 = vmatmul.bf16.gmra.mxu0 %v1226
        %v1271 = vpop.f32.mrf.mxu0
        %v1272 = vadd.f32 %v1175, %v1271
        %v1273 = vpop.f32.mrf.mxu0
        %v1274 = vadd.f32 %v1176, %v1273
        %1275 = vmatmul.bf16.gmra.mxu0 %v1227
        %v1276 = vpop.f32.mrf.mxu0
        %v1277 = vadd.f32 %v1177, %v1276
        %v1278 = vpop.f32.mrf.mxu0
        %v1279 = vadd.f32 %v1178, %v1278
        %1280 = vmatmul.bf16.gmra.mxu0 %v1228
        %v1281 = vpop.f32.mrf.mxu0
        %v1282 = vadd.f32 %v1179, %v1281
        %v1283 = vpop.f32.mrf.mxu0
        %v1284 = vadd.f32 %v1180, %v1283
        %1285 = vdwg.mxu0
        %v1286 = vmul.f32 %v1028, %v1247
        %v1287 = vmul.f32 %v1029, %v1249
        %v1288 = vmul.f32 %v1030, %v1252
        %v1289 = vmul.f32 %v1031, %v1254
        %v1290 = vmul.f32 %v1032, %v1257
        %v1291 = vmul.f32 %v1033, %v1259
        %v1292 = vmul.f32 %v1034, %v1262
        %v1293 = vmul.f32 %v1035, %v1264
        %v1294 = vmul.f32 %v1036, %v1267
        %v1295 = vmul.f32 %v1037, %v1269
        %v1296 = vmul.f32 %v1038, %v1272
        %v1297 = vmul.f32 %v1039, %v1274
        %v1298 = vmul.f32 %v1040, %v1277
        %v1299 = vmul.f32 %v1041, %v1279
        %v1300 = vmul.f32 %v1042, %v1282
        %v1301 = vmul.f32 %v1043, %v1284
        %v1302 = vld [vmem:[%s7] sm:$0x1]
        %v1304 = vperm.slane %v1302, 0
        %v1306 = vadd.f32 %v1286, %v1304
        %v1307 = vadd.f32 %v1287, %v1304
        %v1308 = vadd.f32 %v1288, %v1304
        %v1309 = vadd.f32 %v1289, %v1304
        %v1310 = vadd.f32 %v1290, %v1304
        %v1311 = vadd.f32 %v1291, %v1304
        %v1312 = vadd.f32 %v1292, %v1304
        %v1313 = vadd.f32 %v1293, %v1304
        %v1314 = vadd.f32 %v1294, %v1304
        %v1315 = vadd.f32 %v1295, %v1304
        %v1316 = vadd.f32 %v1296, %v1304
        %v1317 = vadd.f32 %v1297, %v1304
        %v1318 = vadd.f32 %v1298, %v1304
        %v1319 = vadd.f32 %v1299, %v1304
        %v1320 = vadd.f32 %v1300, %v1304
        %v1321 = vadd.f32 %v1301, %v1304
        %vm1322 = vcmp.gt.f32.partialorder %v1306, 0.0
        %vm1323 = vcmp.gt.f32.partialorder %v1307, 0.0
        %vm1324 = vcmp.gt.f32.partialorder %v1308, 0.0
        %vm1325 = vcmp.gt.f32.partialorder %v1309, 0.0
        %vm1326 = vcmp.gt.f32.partialorder %v1310, 0.0
        %vm1327 = vcmp.gt.f32.partialorder %v1311, 0.0
        %vm1328 = vcmp.gt.f32.partialorder %v1312, 0.0
        %vm1329 = vcmp.gt.f32.partialorder %v1313, 0.0
        %vm1330 = vcmp.gt.f32.partialorder %v1314, 0.0
        %vm1331 = vcmp.gt.f32.partialorder %v1315, 0.0
        %vm1332 = vcmp.gt.f32.partialorder %v1316, 0.0
        %vm1333 = vcmp.gt.f32.partialorder %v1317, 0.0
        %vm1334 = vcmp.gt.f32.partialorder %v1318, 0.0
        %vm1335 = vcmp.gt.f32.partialorder %v1319, 0.0
        %vm1336 = vcmp.gt.f32.partialorder %v1320, 0.0
        %vm1337 = vcmp.gt.f32.partialorder %v1321, 0.0
        %v1338 = vmul.f32 %v1306, 1.442695
        %v1339 = vpow.pop %v1338
        %v1340 = vmul.f32 %v1307, 1.442695
        %v1341 = vpow.pop %v1340
        %v1342 = vmul.f32 %v1308, 1.442695
        %v1343 = vpow.pop %v1342
        %v1344 = vmul.f32 %v1309, 1.442695
        %v1345 = vpow.pop %v1344
        %v1346 = vmul.f32 %v1310, 1.442695
        %v1347 = vpow.pop %v1346
        %v1348 = vmul.f32 %v1311, 1.442695
        %v1349 = vpow.pop %v1348
        %v1350 = vmul.f32 %v1312, 1.442695
        %v1351 = vpow.pop %v1350
        %v1352 = vmul.f32 %v1313, 1.442695
        %v1353 = vpow.pop %v1352
        %v1354 = vmul.f32 %v1314, 1.442695
        %v1355 = vpow.pop %v1354
        %v1356 = vmul.f32 %v1315, 1.442695
        %v1357 = vpow.pop %v1356
        %v1358 = vmul.f32 %v1316, 1.442695
        %v1359 = vpow.pop %v1358
        %v1360 = vmul.f32 %v1317, 1.442695
        %v1361 = vpow.pop %v1360
        %v1362 = vmul.f32 %v1318, 1.442695
        %v1363 = vpow.pop %v1362
        %v1364 = vmul.f32 %v1319, 1.442695
        %v1365 = vpow.pop %v1364
        %v1366 = vmul.f32 %v1320, 1.442695
        %v1367 = vpow.pop %v1366
        %v1368 = vmul.f32 %v1321, 1.442695
        %v1369 = vpow.pop %v1368
        %v1370 = vsub.f32 %v1339, 1.0
        %v1371 = vsub.f32 %v1341, 1.0
        %v1372 = vsub.f32 %v1343, 1.0
        %v1373 = vsub.f32 %v1345, 1.0
        %v1374 = vsub.f32 %v1347, 1.0
        %v1375 = vsub.f32 %v1349, 1.0
        %v1376 = vsub.f32 %v1351, 1.0
        %v1377 = vsub.f32 %v1353, 1.0
        %v1378 = vsub.f32 %v1355, 1.0
        %v1379 = vsub.f32 %v1357, 1.0
        %v1380 = vsub.f32 %v1359, 1.0
        %v1381 = vsub.f32 %v1361, 1.0
        %v1382 = vsub.f32 %v1363, 1.0
        %v1383 = vsub.f32 %v1365, 1.0
        %v1384 = vsub.f32 %v1367, 1.0
        %v1385 = vsub.f32 %v1369, 1.0
        %v1386 = vmul.f32 %v1370, 1.6732632
        %v1387 = vmul.f32 %v1371, 1.6732632
        %v1388 = vmul.f32 %v1372, 1.6732632
        %v1389 = vmul.f32 %v1373, 1.6732632
        %v1390 = vmul.f32 %v1374, 1.6732632
        %v1391 = vmul.f32 %v1375, 1.6732632
        %v1392 = vmul.f32 %v1376, 1.6732632
        %v1393 = vmul.f32 %v1377, 1.6732632
        %v1394 = vmul.f32 %v1378, 1.6732632
        %v1395 = vmul.f32 %v1379, 1.6732632
        %v1396 = vmul.f32 %v1380, 1.6732632
        %v1397 = vmul.f32 %v1381, 1.6732632
        %v1398 = vmul.f32 %v1382, 1.6732632
        %v1399 = vmul.f32 %v1383, 1.6732632
        %v1400 = vmul.f32 %v1384, 1.6732632
        %v1401 = vmul.f32 %v1385, 1.6732632
        %v1402 = vsel %vm1322, %v1306, %v1386
        %v1403 = vsel %vm1323, %v1307, %v1387
        %v1404 = vsel %vm1324, %v1308, %v1388
        %v1405 = vsel %vm1325, %v1309, %v1389
        %v1406 = vsel %vm1326, %v1310, %v1390
        %v1407 = vsel %vm1327, %v1311, %v1391
        %v1408 = vsel %vm1328, %v1312, %v1392
        %v1409 = vsel %vm1329, %v1313, %v1393
        %v1410 = vsel %vm1330, %v1314, %v1394
        %v1411 = vsel %vm1331, %v1315, %v1395
        %v1412 = vsel %vm1332, %v1316, %v1396
        %v1413 = vsel %vm1333, %v1317, %v1397
        %v1414 = vsel %vm1334, %v1318, %v1398
        %v1415 = vsel %vm1335, %v1319, %v1399
        %v1416 = vsel %vm1336, %v1320, %v1400
        %v1417 = vsel %vm1337, %v1321, %v1401
        %v1418 = vmul.f32 %v1402, 1.050701
        %v1419 = vmul.f32 %v1403, 1.050701
        %v1420 = vmul.f32 %v1404, 1.050701
        %v1421 = vmul.f32 %v1405, 1.050701
        %v1422 = vmul.f32 %v1406, 1.050701
        %v1423 = vmul.f32 %v1407, 1.050701
        %v1424 = vmul.f32 %v1408, 1.050701
        %v1425 = vmul.f32 %v1409, 1.050701
        %v1426 = vmul.f32 %v1410, 1.050701
        %v1427 = vmul.f32 %v1411, 1.050701
        %v1428 = vmul.f32 %v1412, 1.050701
        %v1429 = vmul.f32 %v1413, 1.050701
        %v1430 = vmul.f32 %v1414, 1.050701
        %v1431 = vmul.f32 %v1415, 1.050701
        %v1432 = vmul.f32 %v1416, 1.050701
        %v1433 = vmul.f32 %v1417, 1.050701
        %v1434 = vmul.f32 %v1418, %v591
        %v1435 = vmul.f32 %v1419, %v592
        %v1436 = vmul.f32 %v1420, %v593
        %v1437 = vmul.f32 %v1421, %v594
        %v1438 = vmul.f32 %v1422, %v595
        %v1439 = vmul.f32 %v1423, %v596
        %v1440 = vmul.f32 %v1424, %v597
        %v1441 = vmul.f32 %v1425, %v598
        %v1442 = vmul.f32 %v1426, %v599
        %v1443 = vmul.f32 %v1427, %v600
        %v1444 = vmul.f32 %v1428, %v601
        %v1445 = vmul.f32 %v1429, %v602
        %v1446 = vmul.f32 %v1430, %v603
        %v1447 = vmul.f32 %v1431, %v604
        %v1448 = vmul.f32 %v1432, %v605
        %v1449 = vmul.f32 %v1433, %v606
        %v1450 = vpack.c.bf16 %v1435, %v1434
        %v1451 = vpack.c.bf16 %v1437, %v1436
        %v1452 = vpack.c.bf16 %v1439, %v1438
        %v1453 = vpack.c.bf16 %v1441, %v1440
        %v1454 = vpack.c.bf16 %v1443, %v1442
        %v1455 = vpack.c.bf16 %v1445, %v1444
        %v1456 = vpack.c.bf16 %v1447, %v1446
        %v1457 = vpack.c.bf16 %v1449, %v1448
        %v1458 = vld [vmem:[#allocation10] sm:$0xf]
        %v1459 = vld [vmem:[#allocation10 + $0x4] sm:$0xf]
        %v1460 = vld [vmem:[#allocation10 + $0x8] sm:$0xf]
        %v1461 = vld [vmem:[#allocation10 + $0xc] sm:$0xf]
        %v1462 = vld [vmem:[#allocation10 + $0x10] sm:$0xf]
        %v1463 = vld [vmem:[#allocation10 + $0x14] sm:$0xf]
        %v1464 = vld [vmem:[#allocation10 + $0x18] sm:$0xf]
        %v1465 = vld [vmem:[#allocation10 + $0x1c] sm:$0xf]
        %v1466 = vld [vmem:[#allocation10 + $0x20] sm:$0xf]
        %v1467 = vld [vmem:[#allocation10 + $0x24] sm:$0xf]
        %v1468 = vld [vmem:[#allocation10 + $0x28] sm:$0xf]
        %v1469 = vld [vmem:[#allocation10 + $0x2c] sm:$0xf]
        %v1470 = vld [vmem:[#allocation10 + $0x30] sm:$0xf]
        %v1471 = vld [vmem:[#allocation10 + $0x34] sm:$0xf]
        %v1472 = vld [vmem:[#allocation10 + $0x38] sm:$0xf]
        %v1473 = vld [vmem:[#allocation10 + $0x3c] sm:$0xf]
        %v1474 = vld [vmem:[%s9] sm:$0x1]
        %v1476 = vperm.slane %v1474, 0
        %v1494 = vunpack.c.l.b16 %v1458
        %v1495 = vunpack.c.l.b16 %v1459
        %v1496 = vunpack.c.l.b16 %v1460
        %v1497 = vunpack.c.l.b16 %v1461
        %v1498 = vunpack.c.l.b16 %v1462
        %v1499 = vunpack.c.l.b16 %v1463
        %v1500 = vunpack.c.l.b16 %v1464
        %v1501 = vunpack.c.l.b16 %v1465
        %v1502 = vunpack.c.l.b16 %v1466
        %v1503 = vunpack.c.l.b16 %v1467
        %v1504 = vunpack.c.l.b16 %v1468
        %v1505 = vunpack.c.l.b16 %v1469
        %v1506 = vunpack.c.l.b16 %v1470
        %v1507 = vunpack.c.l.b16 %v1471
        %v1508 = vunpack.c.l.b16 %v1472
        %v1509 = vunpack.c.l.b16 %v1473
        %v1510 = vpack.c.b16 %v1495, %v1494
        %v1511 = vpack.c.b16 %v1497, %v1496
        %v1512 = vpack.c.b16 %v1499, %v1498
        %v1513 = vpack.c.b16 %v1501, %v1500
        %v1514 = vpack.c.b16 %v1503, %v1502
        %v1515 = vpack.c.b16 %v1505, %v1504
        %v1516 = vpack.c.b16 %v1507, %v1506
        %v1517 = vpack.c.b16 %v1509, %v1508
        %1526 = vmatpush.bf16.msra.mxu0 %v1517
        %1527 = vmatpush.bf16.msra.mxu0 %v1516
        %1528 = vmatpush.bf16.msra.mxu0 %v1515
        %1529 = vmatpush.bf16.msra.mxu0 %v1514
        %1530 = vmatpush.bf16.msra.mxu0 %v1513
        %1531 = vmatpush.bf16.msra.mxu0 %v1512
        %1532 = vmatpush.bf16.msra.mxu0 %v1511
        %1533 = vmatpush.bf16.msra.mxu0 %v1510
        %1534 = vmatmul.bf16.gmra.mxu0 %v1450
        %v1535 = vpop.f32.mrf.mxu0
        %v1536 = vadd.f32 %v1476, %v1535
        %v1537 = vpop.f32.mrf.mxu0
        %v1538 = vadd.f32 %v1476, %v1537
        %1539 = vmatmul.bf16.gmra.mxu0 %v1451
        %v1540 = vpop.f32.mrf.mxu0
        %v1541 = vadd.f32 %v1476, %v1540
        %v1542 = vpop.f32.mrf.mxu0
        %v1543 = vadd.f32 %v1476, %v1542
        %1544 = vmatmul.bf16.gmra.mxu0 %v1452
        %v1545 = vpop.f32.mrf.mxu0
        %v1546 = vadd.f32 %v1476, %v1545
        %v1547 = vpop.f32.mrf.mxu0
        %v1548 = vadd.f32 %v1476, %v1547
        %1549 = vmatmul.bf16.gmra.mxu0 %v1453
        %v1550 = vpop.f32.mrf.mxu0
        %v1551 = vadd.f32 %v1476, %v1550
        %v1552 = vpop.f32.mrf.mxu0
        %v1553 = vadd.f32 %v1476, %v1552
        %1554 = vmatmul.bf16.gmra.mxu0 %v1454
        %v1555 = vpop.f32.mrf.mxu0
        %v1556 = vadd.f32 %v1476, %v1555
        %v1557 = vpop.f32.mrf.mxu0
        %v1558 = vadd.f32 %v1476, %v1557
        %1559 = vmatmul.bf16.gmra.mxu0 %v1455
        %v1560 = vpop.f32.mrf.mxu0
        %v1561 = vadd.f32 %v1476, %v1560
        %v1562 = vpop.f32.mrf.mxu0
        %v1563 = vadd.f32 %v1476, %v1562
        %1564 = vmatmul.bf16.gmra.mxu0 %v1456
        %v1565 = vpop.f32.mrf.mxu0
        %v1566 = vadd.f32 %v1476, %v1565
        %v1567 = vpop.f32.mrf.mxu0
        %v1568 = vadd.f32 %v1476, %v1567
        %1569 = vmatmul.bf16.gmra.mxu0 %v1457
        %v1570 = vpop.f32.mrf.mxu0
        %v1571 = vadd.f32 %v1476, %v1570
        %v1572 = vpop.f32.mrf.mxu0
        %v1573 = vadd.f32 %v1476, %v1572
        %1574 = vdwg.mxu0
        %1575 = vmax.xlane.f32.xlu0 %v1536
        %v1576 = vpop.xlane.xlu0 %1575
        %1577 = vmax.xlane.f32.xlu0 %v1538
        %v1578 = vpop.xlane.xlu0 %1577
        %1579 = vmax.xlane.f32.xlu0 %v1541
        %v1580 = vpop.xlane.xlu0 %1579
        %1581 = vmax.xlane.f32.xlu0 %v1543
        %v1582 = vpop.xlane.xlu0 %1581
        %1583 = vmax.xlane.f32.xlu0 %v1546
        %v1584 = vpop.xlane.xlu0 %1583
        %1585 = vmax.xlane.f32.xlu0 %v1548
        %v1586 = vpop.xlane.xlu0 %1585
        %1587 = vmax.xlane.f32.xlu0 %v1551
        %v1588 = vpop.xlane.xlu0 %1587
        %1589 = vmax.xlane.f32.xlu0 %v1553
        %v1590 = vpop.xlane.xlu0 %1589
        %1591 = vmax.xlane.f32.xlu0 %v1556
        %v1592 = vpop.xlane.xlu0 %1591
        %1593 = vmax.xlane.f32.xlu0 %v1558
        %v1594 = vpop.xlane.xlu0 %1593
        %1595 = vmax.xlane.f32.xlu0 %v1561
        %v1596 = vpop.xlane.xlu0 %1595
        %1597 = vmax.xlane.f32.xlu0 %v1563
        %v1598 = vpop.xlane.xlu0 %1597
        %1599 = vmax.xlane.f32.xlu0 %v1566
        %v1600 = vpop.xlane.xlu0 %1599
        %1601 = vmax.xlane.f32.xlu0 %v1568
        %v1602 = vpop.xlane.xlu0 %1601
        %1603 = vmax.xlane.f32.xlu0 %v1571
        %v1604 = vpop.xlane.xlu0 %1603
        %1605 = vmax.xlane.f32.xlu0 %v1573
        %v1606 = vpop.xlane.xlu0 %1605
        %v1607 = vsub.f32 %v1536, %v1576
        %v1608 = vsub.f32 %v1538, %v1578
        %v1609 = vsub.f32 %v1541, %v1580
        %v1610 = vsub.f32 %v1543, %v1582
        %v1611 = vsub.f32 %v1546, %v1584
        %v1612 = vsub.f32 %v1548, %v1586
        %v1613 = vsub.f32 %v1551, %v1588
        %v1614 = vsub.f32 %v1553, %v1590
        %v1615 = vsub.f32 %v1556, %v1592
        %v1616 = vsub.f32 %v1558, %v1594
        %v1617 = vsub.f32 %v1561, %v1596
        %v1618 = vsub.f32 %v1563, %v1598
        %v1619 = vsub.f32 %v1566, %v1600
        %v1620 = vsub.f32 %v1568, %v1602
        %v1621 = vsub.f32 %v1571, %v1604
        %v1622 = vsub.f32 %v1573, %v1606
        %v1623 = vmul.f32 %v1607, 1.442695
        %v1624 = vpow.pop %v1623
        %v1625 = vmul.f32 %v1608, 1.442695
        %v1626 = vpow.pop %v1625
        %v1627 = vmul.f32 %v1609, 1.442695
        %v1628 = vpow.pop %v1627
        %v1629 = vmul.f32 %v1610, 1.442695
        %v1630 = vpow.pop %v1629
        %v1631 = vmul.f32 %v1611, 1.442695
        %v1632 = vpow.pop %v1631
        %v1633 = vmul.f32 %v1612, 1.442695
        %v1634 = vpow.pop %v1633
        %v1635 = vmul.f32 %v1613, 1.442695
        %v1636 = vpow.pop %v1635
        %v1637 = vmul.f32 %v1614, 1.442695
        %v1638 = vpow.pop %v1637
        %v1639 = vmul.f32 %v1615, 1.442695
        %v1640 = vpow.pop %v1639
        %v1641 = vmul.f32 %v1616, 1.442695
        %v1642 = vpow.pop %v1641
        %v1643 = vmul.f32 %v1617, 1.442695
        %v1644 = vpow.pop %v1643
        %v1645 = vmul.f32 %v1618, 1.442695
        %v1646 = vpow.pop %v1645
        %v1647 = vmul.f32 %v1619, 1.442695
        %v1648 = vpow.pop %v1647
        %v1649 = vmul.f32 %v1620, 1.442695
        %v1650 = vpow.pop %v1649
        %v1651 = vmul.f32 %v1621, 1.442695
        %v1652 = vpow.pop %v1651
        %v1653 = vmul.f32 %v1622, 1.442695
        %v1654 = vpow.pop %v1653
        %1655 = vadd.xlane.f32.xlu0 %v1624
        %v1656 = vpop.xlane.xlu0 %1655
        %1657 = vadd.xlane.f32.xlu0 %v1626
        %v1658 = vpop.xlane.xlu0 %1657
        %1659 = vadd.xlane.f32.xlu0 %v1628
        %v1660 = vpop.xlane.xlu0 %1659
        %1661 = vadd.xlane.f32.xlu0 %v1630
        %v1662 = vpop.xlane.xlu0 %1661
        %1663 = vadd.xlane.f32.xlu0 %v1632
        %v1664 = vpop.xlane.xlu0 %1663
        %1665 = vadd.xlane.f32.xlu0 %v1634
        %v1666 = vpop.xlane.xlu0 %1665
        %1667 = vadd.xlane.f32.xlu0 %v1636
        %v1668 = vpop.xlane.xlu0 %1667
        %1669 = vadd.xlane.f32.xlu0 %v1638
        %v1670 = vpop.xlane.xlu0 %1669
        %1671 = vadd.xlane.f32.xlu0 %v1640
        %v1672 = vpop.xlane.xlu0 %1671
        %1673 = vadd.xlane.f32.xlu0 %v1642
        %v1674 = vpop.xlane.xlu0 %1673
        %1675 = vadd.xlane.f32.xlu0 %v1644
        %v1676 = vpop.xlane.xlu0 %1675
        %1677 = vadd.xlane.f32.xlu0 %v1646
        %v1678 = vpop.xlane.xlu0 %1677
        %1679 = vadd.xlane.f32.xlu0 %v1648
        %v1680 = vpop.xlane.xlu0 %1679
        %1681 = vadd.xlane.f32.xlu0 %v1650
        %v1682 = vpop.xlane.xlu0 %1681
        %1683 = vadd.xlane.f32.xlu0 %v1652
        %v1684 = vpop.xlane.xlu0 %1683
        %1685 = vadd.xlane.f32.xlu0 %v1654
        %v1686 = vpop.xlane.xlu0 %1685
        %v1687 = vrcp.pop %v1656
        %v1688 = vrcp.pop %v1658
        %v1689 = vrcp.pop %v1660
        %v1690 = vrcp.pop %v1662
        %v1691 = vrcp.pop %v1664
        %v1692 = vrcp.pop %v1666
        %v1693 = vrcp.pop %v1668
        %v1694 = vrcp.pop %v1670
        %v1695 = vrcp.pop %v1672
        %v1696 = vrcp.pop %v1674
        %v1697 = vrcp.pop %v1676
        %v1698 = vrcp.pop %v1678
        %v1699 = vrcp.pop %v1680
        %v1700 = vrcp.pop %v1682
        %v1701 = vrcp.pop %v1684
        %v1702 = vrcp.pop %v1686
        %v1703 = vmul.f32 %v1624, %v1687
        %v1704 = vmul.f32 %v1626, %v1688
        %v1705 = vmul.f32 %v1628, %v1689
        %v1706 = vmul.f32 %v1630, %v1690
        %v1707 = vmul.f32 %v1632, %v1691
        %v1708 = vmul.f32 %v1634, %v1692
        %v1709 = vmul.f32 %v1636, %v1693
        %v1710 = vmul.f32 %v1638, %v1694
        %v1711 = vmul.f32 %v1640, %v1695
        %v1712 = vmul.f32 %v1642, %v1696
        %v1713 = vmul.f32 %v1644, %v1697
        %v1714 = vmul.f32 %v1646, %v1698
        %v1715 = vmul.f32 %v1648, %v1699
        %v1716 = vmul.f32 %v1650, %v1700
        %v1717 = vmul.f32 %v1652, %v1701
        %v1718 = vmul.f32 %v1654, %v1702
        %v1719 = vmul.f32 %v1703, %v591
        %v1720 = vmul.f32 %v1704, %v592
        %v1721 = vmul.f32 %v1705, %v593
        %v1722 = vmul.f32 %v1706, %v594
        %v1723 = vmul.f32 %v1707, %v595
        %v1724 = vmul.f32 %v1708, %v596
        %v1725 = vmul.f32 %v1709, %v597
        %v1726 = vmul.f32 %v1710, %v598
        %v1727 = vmul.f32 %v1711, %v599
        %v1728 = vmul.f32 %v1712, %v600
        %v1729 = vmul.f32 %v1713, %v601
        %v1730 = vmul.f32 %v1714, %v602
        %v1731 = vmul.f32 %v1715, %v603
        %v1732 = vmul.f32 %v1716, %v604
        %v1733 = vmul.f32 %v1717, %v605
        %v1734 = vmul.f32 %v1718, %v606
        %v1735 = vpack.c.bf16 %v1720, %v1719
        %v1736 = vpack.c.bf16 %v1722, %v1721
        %v1737 = vpack.c.bf16 %v1724, %v1723
        %v1738 = vpack.c.bf16 %v1726, %v1725
        %v1739 = vpack.c.bf16 %v1728, %v1727
        %v1740 = vpack.c.bf16 %v1730, %v1729
        %v1741 = vpack.c.bf16 %v1732, %v1731
        %v1742 = vpack.c.bf16 %v1734, %v1733
        %1743 = vxpose.xlu0.b32.start [1/16] %v1719, 128
        %1744 = vxpose.xlu0.b32.cont [2/16] %v1720, 128
        %1745 = vxpose.xlu0.b32.cont [3/16] %v1721, 128
        %1746 = vxpose.xlu0.b32.cont [4/16] %v1722, 128
        %1747 = vxpose.xlu0.b32.cont [5/16] %v1723, 128
        %1748 = vxpose.xlu0.b32.cont [6/16] %v1724, 128
        %1749 = vxpose.xlu0.b32.cont [7/16] %v1725, 128
        %1750 = vxpose.xlu0.b32.cont [8/16] %v1726, 128
        %1751 = vxpose.xlu0.b32.cont [9/16] %v1727, 128
        %1752 = vxpose.xlu0.b32.cont [10/16] %v1728, 128
        %1753 = vxpose.xlu0.b32.cont [11/16] %v1729, 128
        %1754 = vxpose.xlu0.b32.cont [12/16] %v1730, 128
        %1755 = vxpose.xlu0.b32.cont [13/16] %v1731, 128
        %1756 = vxpose.xlu0.b32.cont [14/16] %v1732, 128
        %1757 = vxpose.xlu0.b32.cont [15/16] %v1733, 128
        %1758 = vxpose.xlu0.b32.end [16/16] %v1734, 128
        %v1759 = vpop.trf.xlu0
        %v1760 = vpop.trf.xlu0
        %v1761 = vpop.trf.xlu0
        %v1762 = vpop.trf.xlu0
        %v1763 = vpop.trf.xlu0
        %v1764 = vpop.trf.xlu0
        %v1765 = vpop.trf.xlu0
        %v1766 = vpop.trf.xlu0
        %v1767 = vpop.trf.xlu0
        %v1768 = vpop.trf.xlu0
        %v1769 = vpop.trf.xlu0
        %v1770 = vpop.trf.xlu0
        %v1771 = vpop.trf.xlu0
        %v1772 = vpop.trf.xlu0
        %v1773 = vpop.trf.xlu0
        %v1774 = vpop.trf.xlu0
        %v1775 = vpack.c.bf16 %v1759, %v1759
        %1776 = vmatpush.bf16.msra.mxu0 %v1457
        %1777 = vmatpush.bf16.msra.mxu0 %v1456
        %1778 = vmatpush.bf16.msra.mxu0 %v1455
        %1779 = vmatpush.bf16.msra.mxu0 %v1454
        %1780 = vmatpush.bf16.msra.mxu0 %v1453
        %1781 = vmatpush.bf16.msra.mxu0 %v1452
        %1782 = vmatpush.bf16.msra.mxu0 %v1451
        %1783 = vmatpush.bf16.msra.mxu0 %v1450
        %1784 = vmatmul.bf16.gmra.mxu0 %v1775
        %v1785 = vpop.f32.mrf.mxu0
        %v1786 = vadd.f32 0.0, %v1785
        %v1787 = vpop.f32.mrf.mxu0
        %1788 = vdwg.mxu0
        %vm1789 = vcmp.gt.f32.partialorder %v1786, 0.0
        %v1790 = vmul.f32 %v1786, 1.442695
        %v1791 = vpow.pop %v1790
        %v1792 = vsub.f32 %v1791, 1.0
        %v1793 = vmul.f32 %v1792, 1.6732632
        %v1794 = vsel %vm1789, %v1786, %v1793
        %v1795 = vmul.f32 %v1794, 1.050701
        %1796 = vmax.xlane.f32.xlu0 %v1795
        %v1797 = vpop.xlane.xlu0 %1796
        %v1798 = vsub.f32 %v1795, %v1797
        %v1799 = vmul.f32 %v1798, 1.442695
        %v1800 = vpow.pop %v1799
        %1801 = vadd.xlane.f32.xlu0 %v1800
        %v1802 = vpop.xlane.xlu0 %1801
        %v1803 = vlog2.pop %v1802
        %v1804 = vmul.f32 %v1803, 0.6931472
        %v1805 = vsub.f32 %v1798, %v1804
        %1806 = vst [vmem:[%s501] sm:$0xff] %v1805
        %1807 = vst [vmem:[%s494] sm:$0xff] %v1759
        %1808 = vmatpush.bf16.msra.mxu0 %v1742
        %1809 = vmatpush.bf16.msra.mxu0 %v1741
        %1810 = vmatpush.bf16.msra.mxu0 %v1740
        %1811 = vmatpush.bf16.msra.mxu0 %v1739
        %1812 = vmatpush.bf16.msra.mxu0 %v1738
        %1813 = vmatpush.bf16.msra.mxu0 %v1737
        %1814 = vmatpush.bf16.msra.mxu0 %v1736
        %1815 = vmatpush.bf16.msra.mxu0 %v1735
        %1816 = vmatmul.bf16.gmra.mxu0 %v1221
        %v1817 = vpop.f32.mrf.mxu0
        %v1818 = vadd.f32 0.0, %v1817
        %v1819 = vpop.f32.mrf.mxu0
        %v1820 = vadd.f32 0.0, %v1819
        %1821 = vmatmul.bf16.gmra.mxu0 %v1222
        %v1822 = vpop.f32.mrf.mxu0
        %v1823 = vadd.f32 0.0, %v1822
        %v1824 = vpop.f32.mrf.mxu0
        %v1825 = vadd.f32 0.0, %v1824
        %1826 = vmatmul.bf16.gmra.mxu0 %v1223
        %v1827 = vpop.f32.mrf.mxu0
        %v1828 = vadd.f32 0.0, %v1827
        %v1829 = vpop.f32.mrf.mxu0
        %v1830 = vadd.f32 0.0, %v1829
        %1831 = vmatmul.bf16.gmra.mxu0 %v1224
        %v1832 = vpop.f32.mrf.mxu0
        %v1833 = vadd.f32 0.0, %v1832
        %v1834 = vpop.f32.mrf.mxu0
        %v1835 = vadd.f32 0.0, %v1834
        %1836 = vmatmul.bf16.gmra.mxu0 %v1225
        %v1837 = vpop.f32.mrf.mxu0
        %v1838 = vadd.f32 0.0, %v1837
        %v1839 = vpop.f32.mrf.mxu0
        %v1840 = vadd.f32 0.0, %v1839
        %1841 = vmatmul.bf16.gmra.mxu0 %v1226
        %v1842 = vpop.f32.mrf.mxu0
        %v1843 = vadd.f32 0.0, %v1842
        %v1844 = vpop.f32.mrf.mxu0
        %v1845 = vadd.f32 0.0, %v1844
        %1846 = vmatmul.bf16.gmra.mxu0 %v1227
        %v1847 = vpop.f32.mrf.mxu0
        %v1848 = vadd.f32 0.0, %v1847
        %v1849 = vpop.f32.mrf.mxu0
        %v1850 = vadd.f32 0.0, %v1849
        %1851 = vmatmul.bf16.gmra.mxu0 %v1228
        %v1852 = vpop.f32.mrf.mxu0
        %v1853 = vadd.f32 0.0, %v1852
        %v1854 = vpop.f32.mrf.mxu0
        %v1855 = vadd.f32 0.0, %v1854
        %1856 = vdwg.mxu0
        %v1857 = vmul.f32 %v1719, %v1818
        %v1858 = vmul.f32 %v1720, %v1820
        %v1859 = vmul.f32 %v1721, %v1823
        %v1860 = vmul.f32 %v1722, %v1825
        %v1861 = vmul.f32 %v1723, %v1828
        %v1862 = vmul.f32 %v1724, %v1830
        %v1863 = vmul.f32 %v1725, %v1833
        %v1864 = vmul.f32 %v1726, %v1835
        %v1865 = vmul.f32 %v1727, %v1838
        %v1866 = vmul.f32 %v1728, %v1840
        %v1867 = vmul.f32 %v1729, %v1843
        %v1868 = vmul.f32 %v1730, %v1845
        %v1869 = vmul.f32 %v1731, %v1848
        %v1870 = vmul.f32 %v1732, %v1850
        %v1871 = vmul.f32 %v1733, %v1853
        %v1872 = vmul.f32 %v1734, %v1855
        %v1873 = vadd.f32 %v1857, %v1858
        %v1874 = vadd.f32 %v1873, %v1859
        %v1875 = vadd.f32 %v1874, %v1860
        %v1876 = vadd.f32 %v1875, %v1861
        %v1877 = vadd.f32 %v1876, %v1862
        %v1878 = vadd.f32 %v1877, %v1863
        %v1879 = vadd.f32 %v1878, %v1864
        %v1880 = vadd.f32 %v1879, %v1865
        %v1881 = vadd.f32 %v1880, %v1866
        %v1882 = vadd.f32 %v1881, %v1867
        %v1883 = vadd.f32 %v1882, %v1868
        %v1884 = vadd.f32 %v1883, %v1869
        %v1885 = vadd.f32 %v1884, %v1870
        %v1886 = vadd.f32 %v1885, %v1871
        %v1887 = vadd.f32 %v1886, %v1872
        %1888 = vadd.xlane.f32.xlu0 %v1887
        %v1889 = vpop.xlane.xlu0 %1888
        %v1890 = vrot.slane %v1889, 4
        %v1891 = vadd.f32 %v1889, %v1890
        %v1892 = vrot.slane %v1891, 2
        %v1893 = vadd.f32 %v1891, %v1892
        %v1894 = vrot.slane %v1893, 1
        %v1895 = vadd.f32 %v1893, %v1894
        %s1896 = vtos %v1895
        %v1897 = vstv %s1896
        %v1898 = vadd.f32 %v1818, %v1820
        %v1899 = vadd.f32 %v1898, %v1823
        %v1900 = vadd.f32 %v1899, %v1825
        %v1901 = vadd.f32 %v1900, %v1828
        %v1902 = vadd.f32 %v1901, %v1830
        %v1903 = vadd.f32 %v1902, %v1833
        %v1904 = vadd.f32 %v1903, %v1835
        %v1905 = vadd.f32 %v1904, %v1838
        %v1906 = vadd.f32 %v1905, %v1840
        %v1907 = vadd.f32 %v1906, %v1843
        %v1908 = vadd.f32 %v1907, %v1845
        %v1909 = vadd.f32 %v1908, %v1848
        %v1910 = vadd.f32 %v1909, %v1850
        %v1911 = vadd.f32 %v1910, %v1853
        %v1912 = vadd.f32 %v1911, %v1855
        %v1913 = vrot.slane %v1912, 4
        %v1914 = vadd.f32 %v1912, %v1913
        %v1915 = vrot.slane %v1914, 2
        %v1916 = vadd.f32 %v1914, %v1915
        %v1917 = vrot.slane %v1916, 1
        %v1918 = vadd.f32 %v1916, %v1917
        %v1919 = vsub.f32 %v836, %v591
        %v1920 = vsub.f32 %v837, %v592
        %v1921 = vsub.f32 %v838, %v593
        %v1922 = vsub.f32 %v839, %v594
        %v1923 = vsub.f32 %v840, %v595
        %v1924 = vsub.f32 %v841, %v596
        %v1925 = vsub.f32 %v842, %v597
        %v1926 = vsub.f32 %v843, %v598
        %v1927 = vsub.f32 %v844, %v599
        %v1928 = vsub.f32 %v845, %v600
        %v1929 = vsub.f32 %v846, %v601
        %v1930 = vsub.f32 %v847, %v602
        %v1931 = vsub.f32 %v848, %v603
        %v1932 = vsub.f32 %v849, %v604
        %v1933 = vsub.f32 %v850, %v605
        %v1934 = vsub.f32 %v851, %v606
        %vm1935 = vcmask 7168
        %v1936 = vsel %vm1935, %v1919, 0.0
        %v1937 = vsel %vm1935, %v1920, 0.0
        %v1938 = vadd.f32 %v1936, %v1937
        %v1939 = vsel %vm1935, %v1921, 0.0
        %v1940 = vadd.f32 %v1938, %v1939
        %v1941 = vsel %vm1935, %v1922, 0.0
        %v1942 = vadd.f32 %v1940, %v1941
        %v1943 = vsel %vm1935, %v1923, 0.0
        %v1944 = vadd.f32 %v1942, %v1943
        %v1945 = vsel %vm1935, %v1924, 0.0
        %v1946 = vadd.f32 %v1944, %v1945
        %v1947 = vsel %vm1935, %v1925, 0.0
        %v1948 = vadd.f32 %v1946, %v1947
        %v1949 = vsel %vm1935, %v1926, 0.0
        %v1950 = vadd.f32 %v1948, %v1949
        %v1951 = vsel %vm1935, %v1927, 0.0
        %v1952 = vadd.f32 %v1950, %v1951
        %v1953 = vsel %vm1935, %v1928, 0.0
        %v1954 = vadd.f32 %v1952, %v1953
        %v1955 = vsel %vm1935, %v1929, 0.0
        %v1956 = vadd.f32 %v1954, %v1955
        %v1957 = vsel %vm1935, %v1930, 0.0
        %v1958 = vadd.f32 %v1956, %v1957
        %v1959 = vsel %vm1935, %v1931, 0.0
        %v1960 = vadd.f32 %v1958, %v1959
        %v1961 = vsel %vm1935, %v1932, 0.0
        %v1962 = vadd.f32 %v1960, %v1961
        %v1963 = vsel %vm1935, %v1933, 0.0
        %v1964 = vadd.f32 %v1962, %v1963
        %v1965 = vsel %vm1935, %v1934, 0.0
        %v1966 = vadd.f32 %v1964, %v1965
        %1967 = vadd.xlane.f32.xlu0 %v1966
        %v1968 = vpop.xlane.xlu0 %1967
        %v1969 = vrot.slane %v1968, 4
        %v1970 = vadd.f32 %v1968, %v1969
        %v1971 = vrot.slane %v1970, 2
        %v1972 = vadd.f32 %v1970, %v1971
        %v1973 = vrot.slane %v1972, 1
        %v1974 = vadd.f32 %v1972, %v1973
        %s1975 = vtos %v1974
        %v1976 = vstv %s1975
        %v1977 = vmul.f32 %v1918, %v1918
        %vm1978 = vcmask 1040384
        %v1979 = vsel %vm1978, %v1977, 0.0
        %1980 = vadd.xlane.f32.xlu0 %v1979
        %v1981 = vpop.xlane.xlu0 %1980
        %v1982 = vrot.slane %v1981, 4
        %v1983 = vadd.f32 %v1981, %v1982
        %v1984 = vrot.slane %v1983, 2
        %v1985 = vadd.f32 %v1983, %v1984
        %v1986 = vrot.slane %v1985, 1
        %v1987 = vadd.f32 %v1985, %v1986
        %s1988 = vtos %v1987
        %v1989 = vstv %s1988
        %v1990 = vrcp.pop %v1976
        %v1991 = vmul.f32 %v1976, %v1990
        %v1992 = vsub.f32 1.0, %v1991
        %v1993 = vmul.f32 %v1990, %v1992
        %v1994 = vadd.f32 %v1990, %v1993
        %vm1995 = vweird.f32 %v1976
        %vm1996 = vweird.f32 %v1990
        %vm1997 = vmor %vm1995, %vm1996
        %v1998 = vsel %vm1997, %v1990, %v1994
        %v1999 = vand.u32 2147483647, %v1976
        %vm2000 = vcmp.eq.f32.partialorder %v1999, 8.507059e+37
        %v2001 = vand.u32 %v1976, 2147483648
        %v2002 = vor.u32 1.1754944e-38, %v2001
        %v2003 = vsel %vm2000, %v2002, %v1998
        %v2004 = vmul.f32 %v1989, %v2003
        %v2005 = vsub.f32 %v1897, %v2004
        %v2006 = vsub.f32 0.0, %v2005
        %v2007 = vmul.f32 %v2006, %v2003
        %2008 = vmatpush.bf16.msra.mxu0 %v1742
        %2009 = vmatpush.bf16.msra.mxu0 %v1741
        %2010 = vmatpush.bf16.msra.mxu0 %v1740
        %2011 = vmatpush.bf16.msra.mxu0 %v1739
        %2012 = vmatpush.bf16.msra.mxu0 %v1738
        %2013 = vmatpush.bf16.msra.mxu0 %v1737
        %2014 = vmatpush.bf16.msra.mxu0 %v1736
        %2015 = vmatpush.bf16.msra.mxu0 %v1735
        %2016 = vmatmul.bf16.gmra.mxu0 %v1775
        %v2017 = vpop.f32.mrf.mxu0
        %v2018 = vadd.f32 0.0, %v2017
        %v2019 = vpop.f32.mrf.mxu0
        %2020 = vdwg.mxu0
        %v2021 = vmul.f32 %v2018, %v2018
        %2022 = vadd.xlane.f32.xlu0 %v2021
        %v2023 = vpop.xlane.xlu0 %2022
        %v2024 = vrot.slane %v2023, 4
        %v2025 = vadd.f32 %v2023, %v2024
        %v2026 = vrot.slane %v2025, 2
        %v2027 = vadd.f32 %v2025, %v2026
        %v2028 = vrot.slane %v2027, 1
        %v2029 = vadd.f32 %v2027, %v2028
        %s2030 = vtos %v2029
        %v2031 = vstv %s2030
        %v2032 = vrsqrt.pop %v2031
        %v2033 = vmul.f32 %v2032, %v2031
        %v2034 = vmul.f32 %v2033, %v2032
        %v2035 = vmul.f32 0.5, %v2034
        %v2036 = vsub.f32 1.5, %v2035
        %v2037 = vmul.f32 %v2032, %v2036
        %v2038 = vmul.f32 %v2031, %v2037
        %vm2039 = vcmp.eq.f32.partialorder %v2031, inf
        %v2040 = vsel %vm2039, %v2031, %v2038
        %vm2041 = vcmp.eq.f32.partialorder %v2031, 0.0
        %v2042 = vand.u32 %v2031, 2147483648
        %v2043 = vsel %vm2041, %v2042, %v2040
        %v2044 = vmul.f32 %v1719, %v1719
        %v2045 = vmul.f32 %v1720, %v1720
        %v2046 = vmul.f32 %v1721, %v1721
        %v2047 = vmul.f32 %v1722, %v1722
        %v2048 = vmul.f32 %v1723, %v1723
        %v2049 = vmul.f32 %v1724, %v1724
        %v2050 = vmul.f32 %v1725, %v1725
        %v2051 = vmul.f32 %v1726, %v1726
        %v2052 = vmul.f32 %v1727, %v1727
        %v2053 = vmul.f32 %v1728, %v1728
        %v2054 = vmul.f32 %v1729, %v1729
        %v2055 = vmul.f32 %v1730, %v1730
        %v2056 = vmul.f32 %v1731, %v1731
        %v2057 = vmul.f32 %v1732, %v1732
        %v2058 = vmul.f32 %v1733, %v1733
        %v2059 = vmul.f32 %v1734, %v1734
        %v2060 = vadd.f32 %v2044, %v2045
        %v2061 = vadd.f32 %v2060, %v2046
        %v2062 = vadd.f32 %v2061, %v2047
        %v2063 = vadd.f32 %v2062, %v2048
        %v2064 = vadd.f32 %v2063, %v2049
        %v2065 = vadd.f32 %v2064, %v2050
        %v2066 = vadd.f32 %v2065, %v2051
        %v2067 = vadd.f32 %v2066, %v2052
        %v2068 = vadd.f32 %v2067, %v2053
        %v2069 = vadd.f32 %v2068, %v2054
        %v2070 = vadd.f32 %v2069, %v2055
        %v2071 = vadd.f32 %v2070, %v2056
        %v2072 = vadd.f32 %v2071, %v2057
        %v2073 = vadd.f32 %v2072, %v2058
        %v2074 = vadd.f32 %v2073, %v2059
        %2075 = vadd.xlane.f32.xlu0 %v2074
        %v2076 = vpop.xlane.xlu0 %2075
        %v2077 = vrot.slane %v2076, 4
        %v2078 = vadd.f32 %v2076, %v2077
        %v2079 = vrot.slane %v2078, 2
        %v2080 = vadd.f32 %v2078, %v2079
        %v2081 = vrot.slane %v2080, 1
        %v2082 = vadd.f32 %v2080, %v2081
        %s2083 = vtos %v2082
        %v2084 = vstv %s2083
        %v2085 = vmul.f32 %v2084, 2.0
        %v2086 = vmul.f32 %v2085, 0.5
        %v2087 = vrcp.pop %v2043
        %v2088 = vmul.f32 %v2043, %v2087
        %v2089 = vsub.f32 1.0, %v2088
        %v2090 = vmul.f32 %v2087, %v2089
        %v2091 = vadd.f32 %v2087, %v2090
        %vm2092 = vweird.f32 %v2043
        %vm2093 = vweird.f32 %v2087
        %vm2094 = vmor %vm2092, %vm2093
        %v2095 = vsel %vm2094, %v2087, %v2091
        %v2096 = vand.u32 2147483647, %v2043
        %vm2097 = vcmp.eq.f32.partialorder %v2096, 8.507059e+37
        %v2098 = vand.u32 %v2043, 2147483648
        %v2099 = vor.u32 1.1754944e-38, %v2098
        %v2100 = vsel %vm2097, %v2099, %v2095
        %v2101 = vmul.f32 %v2086, %v2100
        %v2102 = vsub.f32 2.0, %v2101
        %v2103 = vmax.f32 %v2102, 0.0
        %v2104 = vrsqrt.pop %v2103
        %v2105 = vmul.f32 %v2104, %v2103
        %v2106 = vmul.f32 %v2105, %v2104
        %v2107 = vmul.f32 0.5, %v2106
        %v2108 = vsub.f32 1.5, %v2107
        %v2109 = vmul.f32 %v2104, %v2108
        %v2110 = vmul.f32 %v2103, %v2109
        %vm2111 = vcmp.eq.f32.partialorder %v2103, inf
        %v2112 = vsel %vm2111, %v2103, %v2110
        %vm2113 = vcmp.eq.f32.partialorder %v2103, 0.0
        %v2114 = vand.u32 %v2103, 2147483648
        %v2115 = vsel %vm2113, %v2114, %v2112
        %v2116 = vadd.f32 %v1719, %v1720
        %v2117 = vadd.f32 %v2116, %v1721
        %v2118 = vadd.f32 %v2117, %v1722
        %v2119 = vadd.f32 %v2118, %v1723
        %v2120 = vadd.f32 %v2119, %v1724
        %v2121 = vadd.f32 %v2120, %v1725
        %v2122 = vadd.f32 %v2121, %v1726
        %v2123 = vadd.f32 %v2122, %v1727
        %v2124 = vadd.f32 %v2123, %v1728
        %v2125 = vadd.f32 %v2124, %v1729
        %v2126 = vadd.f32 %v2125, %v1730
        %v2127 = vadd.f32 %v2126, %v1731
        %v2128 = vadd.f32 %v2127, %v1732
        %v2129 = vadd.f32 %v2128, %v1733
        %v2130 = vadd.f32 %v2129, %v1734
        %v2131 = vrot.slane %v2130, 4
        %v2132 = vadd.f32 %v2130, %v2131
        %v2133 = vrot.slane %v2132, 2
        %v2134 = vadd.f32 %v2132, %v2133
        %v2135 = vrot.slane %v2134, 1
        %v2136 = vadd.f32 %v2134, %v2135
        %v2137 = vmul.f32 %v2136, %v2136
        %v2138 = vsel %vm1978, %v2137, 0.0
        %2139 = vadd.xlane.f32.xlu0 %v2138
        %v2140 = vpop.xlane.xlu0 %2139
        %v2141 = vrot.slane %v2140, 4
        %v2142 = vadd.f32 %v2140, %v2141
        %v2143 = vrot.slane %v2142, 2
        %v2144 = vadd.f32 %v2142, %v2143
        %v2145 = vrot.slane %v2144, 1
        %v2146 = vadd.f32 %v2144, %v2145
        %s2147 = vtos %v2146
        %v2148 = vstv %s2147
        %v2149 = vrsqrt.pop %v2148
        %v2150 = vmul.f32 %v2149, %v2148
        %v2151 = vmul.f32 %v2150, %v2149
        %v2152 = vmul.f32 0.5, %v2151
        %v2153 = vsub.f32 1.5, %v2152
        %v2154 = vmul.f32 %v2149, %v2153
        %v2155 = vmul.f32 %v2148, %v2154
        %vm2156 = vcmp.eq.f32.partialorder %v2148, inf
        %v2157 = vsel %vm2156, %v2148, %v2155
        %vm2158 = vcmp.eq.f32.partialorder %v2148, 0.0
        %v2159 = vand.u32 %v2148, 2147483648
        %v2160 = vsel %vm2158, %v2159, %v2157
        %v2161 = vlaneseq
        %v2162 = vand.u32 %v2161, 127
        %vm2163 = vcmp.eq.s32.totalorder %v2162, 0
        %vm2164 = vcmp.eq.s32.totalorder %v2162, 1
        %vm2165 = vcmp.eq.s32.totalorder %v2162, 2
        %v2166 = vsel %vm2165, %v2160, 0.0
        %v2167 = vsel %vm2164, %v2115, %v2166
        %v2168 = vsel %vm2163, %v2007, %v2167
        %2169 = vst [vmem:[%s507] sm:$0x1] %v2168
        %s2170 = sand.u32 %s252, 1
        %s2171 = scalar_lea.sflag [#allocation6], %s2170
        %s2172 = sand.u32 %s252, 1
        %s2173 = smul.addr %s2172, 8
        %s2174 = scalar_lea.vmem [#allocation12], %s2173
        %s2175 = sand.u32 %s45, 1
        %s2176 = scalar_lea.sflag [#allocation14], %s2175
        %s2177 = sand.u32 %s278, 1
        %s2178 = smul.addr %s2177, 8
        %s2179 = scalar_lea.vmem [#allocation13], %s2178
        %s2180 = sand.u32 %s45, 1
        %s2181 = scalar_lea.sflag [#allocation14], %s2180
        %s2182 = sand.u32 %s304, 1
        %s2183 = scalar_lea.vmem [#allocation15], %s2182
        // Predicated region
        $region73: #{tpu_custom_call.1} parent=55 // pred_check
          %p2184 = pneg %p262
        $region74: #{tpu_custom_call.1} parent=55 // pred_check_branch
          %2186 = sbr.rel (%p2184) target = $region76
        $region75: #{tpu_custom_call.1} parent=55 // pred_region
          %2188 = vsyncadd %s2171, 0
          %s2189 = smul.addr %s45, 8
          %s2190 = scalar_lea.hbm %s10, %s2189
          %s2192 = sshll.u32 %s2174, 4
          %s2193 = int_to_ptr.vmem [resolvable:$true] %s2192
          %s2194 = sshll.u32 %s2190, 4
          %s2195 = int_to_ptr.hbm [resolvable:$true] %s2194
          %2197 = dma.vmem_to_hbm [thread:$0]  %s2193, 128, %s2195, %s2171
        $region76: #{tpu_custom_call.1} parent=55 // pred_fallthru
          _
        // Predicated region
        $region77: #{tpu_custom_call.1} parent=55 // pred_check
          %p2198 = pneg %p288
        $region78: #{tpu_custom_call.1} parent=55 // pred_check_branch
          %2200 = sbr.rel (%p2198) target = $region80
        $region79: #{tpu_custom_call.1} parent=55 // pred_region
          %2202 = vsyncadd %s2176, 0
          %s2203 = smul.addr %s45, 8
          %s2204 = scalar_lea.hbm %s11, %s2203
          %s2206 = sshll.u32 %s2179, 4
          %s2207 = int_to_ptr.vmem [resolvable:$true] %s2206
          %s2208 = sshll.u32 %s2204, 4
          %s2209 = int_to_ptr.hbm [resolvable:$true] %s2208
          %2211 = dma.vmem_to_hbm [thread:$0]  %s2207, 128, %s2209, %s2176
        $region80: #{tpu_custom_call.1} parent=55 // pred_fallthru
          _
        // Predicated region
        $region81: #{tpu_custom_call.1} parent=55 // pred_check
          %p2212 = pneg %p314
        $region82: #{tpu_custom_call.1} parent=55 // pred_check_branch
          %2214 = sbr.rel (%p2212) target = $region84
        $region83: #{tpu_custom_call.1} parent=55 // pred_region
          %2216 = vsyncadd %s2181, 0
          %s2217 = scalar_lea.hbm %s12, %s45
          %s2219 = sshll.u32 %s2183, 4
          %s2220 = int_to_ptr.vmem [resolvable:$true] %s2219
          %s2221 = sshll.u32 %s2217, 4
          %s2222 = int_to_ptr.hbm [resolvable:$true] %s2221
          %2224 = dma.vmem_to_hbm [thread:$0]  %s2220, 16, %s2222, %s2181
        $region84: #{tpu_custom_call.1} parent=55 // pred_fallthru
          _
      $region56: #{tpu_custom_call.1} parent=5 // pred_fallthru
        _
      %p2225 = scmp.le.s32.totalorder 2, %s40
      // Predicated region
      $region85: #{tpu_custom_call.1} parent=5 // pred_check
        %p2226 = pneg %p2225
      $region86: #{tpu_custom_call.1} parent=5 // pred_check_branch
        %2228 = sbr.rel (%p2226) target = $region88
      $region87: #{tpu_custom_call.1} parent=5 // pred_region
        %s2229 = ssub.s32 %s40, 2
        // Predicated region
        $region89: #{tpu_custom_call.1} parent=87 // pred_check
          %p2230 = pneg %p268
        $region90: #{tpu_custom_call.1} parent=87 // pred_check_branch
          %2232 = sbr.rel (%p2230) target = $region92
        $region91: #{tpu_custom_call.1} parent=87 // pred_region
          %s2233 = sand.u32 %s253, 1
          %s2234 = scalar_lea.sflag [#allocation6], %s2233
          %s2235 = sand.u32 %s253, 1
          %s2236 = smul.addr %s2235, 8
          %s2237 = scalar_lea.vmem [#allocation12], %s2236
          %2239 = dma.done %s2234, 128
        $region92: #{tpu_custom_call.1} parent=87 // pred_fallthru
          _
        // Predicated region
        $region93: #{tpu_custom_call.1} parent=87 // pred_check
          %p2240 = pneg %p294
        $region94: #{tpu_custom_call.1} parent=87 // pred_check_branch
          %2242 = sbr.rel (%p2240) target = $region96
        $region95: #{tpu_custom_call.1} parent=87 // pred_region
          %s2243 = sand.u32 %s46, 1
          %s2244 = scalar_lea.sflag [#allocation14], %s2243
          %s2245 = sand.u32 %s279, 1
          %s2246 = smul.addr %s2245, 8
          %s2247 = scalar_lea.vmem [#allocation13], %s2246
          %2249 = dma.done %s2244, 128
        $region96: #{tpu_custom_call.1} parent=87 // pred_fallthru
          _
        // Predicated region
        $region97: #{tpu_custom_call.1} parent=87 // pred_check
          %p2250 = pneg %p320
        $region98: #{tpu_custom_call.1} parent=87 // pred_check_branch
          %2252 = sbr.rel (%p2250) target = $region100
        $region99: #{tpu_custom_call.1} parent=87 // pred_region
          %s2253 = sand.u32 %s46, 1
          %s2254 = scalar_lea.sflag [#allocation14], %s2253
          %s2255 = sand.u32 %s305, 1
          %s2256 = scalar_lea.vmem [#allocation15], %s2255
          %2258 = dma.done %s2254, 16
        $region100: #{tpu_custom_call.1} parent=87 // pred_fallthru
          _
      $region88: #{tpu_custom_call.1} parent=5 // pred_fallthru
        _
    $region6: #{tpu_custom_call.1} parent=1 // loop_footer
      %s44 = sadd.s32 1, %s40
    $region7: #{tpu_custom_call.1} parent=1 // loop_footer_branch
      %39 = sbr.rel target = $region3
    $region8: #{tpu_custom_call.1} parent=1 // loop_exit
      _
    %2259 = vsyncpa [#allocation5], 1
    %s2260 = scalar_lea.sflag [#allocation5], 1
    %2261 = vsyncpa %s2260, 1
    %2262 = vsyncpa [#allocation8], 1
    %s2263 = scalar_lea.sflag [#allocation8], 1
    %2264 = vsyncpa %s2263, 1
    %2265 = vsyncpa [#allocation11], 1
    %2266 = vsyncpa [#allocation6], 1
    %s2267 = scalar_lea.sflag [#allocation6], 1
    %2268 = vsyncpa %s2267, 1
    %2269 = vsyncpa [#allocation14], 1
    %s2270 = scalar_lea.sflag [#allocation14], 1
    %2271 = vsyncpa %s2270, 1

</llo_original>
